<compile_context>
chip_gen: v7x
topology: tpu7x:2x2x1
jax: 0.10.0
libtpu: 0.0.40
codegen_flags: <defaults>
</compile_context>

<pallas_src>
import math
from functools import partial

import jax
import jax.numpy as jnp
from jax import lax
from jax.experimental import pallas as pl
from jax.experimental.pallas import tpu as pltpu

EMBED_DIM = 66
HIDDEN_EMB = 4 * EMBED_DIM      # 264
REG_HIDDEN = 32                 # hidden width of the synthetic regularizer
NUM_CASCADES = 2
NUM_LIST = [4.0, 8.0, 12.0]     # len >= num_cascades + 1


# ---------------------------------------------------------------------------
# BlockSpec helpers
# ---------------------------------------------------------------------------
def _const_spec(shape):
    zeros = (0,) * len(shape)
    return pl.BlockSpec(shape, lambda b, _z=zeros: _z)


def _smem_spec():
    return pl.BlockSpec(memory_space=pltpu.MemorySpace.SMEM)


# ---------------------------------------------------------------------------
# fastmri helpers (glue, plain JAX -- FFT has no Pallas equivalent)
# ---------------------------------------------------------------------------
def ifft2c_c(xc):
    xc = jnp.fft.ifftshift(xc, axes=(-2, -1))
    xc = jnp.fft.ifft2(xc, norm="ortho")
    return jnp.fft.fftshift(xc, axes=(-2, -1))


def fft2c_c(xc):
    xc = jnp.fft.ifftshift(xc, axes=(-2, -1))
    xc = jnp.fft.fft2(xc, norm="ortho")
    return jnp.fft.fftshift(xc, axes=(-2, -1))


def positional_encoding(x, dim=EMBED_DIM):
    # TODO(synk): PositionalEncoding definition not provided; using a
    #             sinusoidal (timestep-style) embedding of the probability
    #             values; sin/cos computed in XLA (a few KB per cascade).
    half = dim // 2
    freqs = jnp.exp(-math.log(10000.0)
                    * jnp.arange(half, dtype=jnp.float32) / half)
    ang = x[..., None] * freqs                                    # (B, W, half)
    return jnp.concatenate([jnp.sin(ang), jnp.cos(ang)], axis=-1)  # (B, W, 66)


# ---------------------------------------------------------------------------
# Pallas kernel 1: fused mask_embedder + norm + regularizer stand-in + unnorm
# One grid step per batch element (parallel on v7x's two TensorCores).
# ---------------------------------------------------------------------------
def _reg_kernel(pe_ref, x_ref, w1_ref, b1_ref, w2_ref, b2_ref,
                g_ref, bt_ref, wct_ref, rw1_ref, rb1_ref, rw2_ref, rb2_ref,
                o_ref):
    # ---- fused mask_embedder: Linear(66,264) -> SiLU -> Linear(264,66) -> LN
    pe = pe_ref[0]                                                   # (W, 66)
    # NOTE: kept f32 for parity with the torch module; cast operands to bf16
    #       (preferred_element_type=f32) on v6e/v7x if parity allows.
    h = jnp.dot(pe, w1_ref[...], preferred_element_type=jnp.float32) + b1_ref[...]
    h = h * jax.nn.sigmoid(h)                                        # SiLU
    y = jnp.dot(h, w2_ref[...], preferred_element_type=jnp.float32) + b2_ref[...]
    mu = jnp.mean(y, axis=-1, keepdims=True)
    var = jnp.mean((y - mu) ** 2, axis=-1, keepdims=True)
    y = (y - mu) * lax.rsqrt(var + 1e-5) * g_ref[...] + bt_ref[...]  # LayerNorm
    cond = jnp.mean(y, axis=0, keepdims=True)                        # (1, 66)
    # conditioning projection 66 -> REG_HIDDEN, result on sublanes (no xpose)
    cb = jnp.sum(wct_ref[...] * cond, axis=-1, keepdims=True)        # (32, 1)

    # ---- per-channel norm over H*W (unbiased std, eps-guarded), full block
    x = x_ref[0]                                                     # (2C, HW)
    hw = x.shape[-1]
    m = jnp.mean(x, axis=-1, keepdims=True)
    sd = jnp.maximum(
        jnp.sqrt(jnp.sum((x - m) ** 2, axis=-1, keepdims=True) / (hw - 1)),
        1e-6)
    xn = (x - m) / sd

    # ---- regularizer stand-in: prob_fea-conditioned per-pixel 2->32->2 MLP
    # TODO(synk): HUMUSBlock_pdac_singlecoil (Swin U-Net) not provided; this
    #             is a structurally compatible stand-in conditioned on the
    #             embedded mask probabilities.
    pre = (xn[0:1, :] * rw1_ref[:, 0:1] + xn[1:2, :] * rw1_ref[:, 1:2]
           + rb1_ref[...] + cb)                                      # (32, HW)
    hact = jax.nn.gelu(pre)
    r0 = jnp.sum(hact * rw2_ref[:, 0:1], axis=0, keepdims=True) + rb2_ref[:, 0:1]
    r1 = jnp.sum(hact * rw2_ref[:, 1:2], axis=0, keepdims=True) + rb2_ref[:, 1:2]
    r = jnp.concatenate([r0, r1], axis=0)                            # (2, HW)

    # ---- residual + fused unnorm, one full-block store
    o_ref[0] = (xn + r) * sd + m


def apply_model(x_chan, pe, params):
    # x_chan: (B, 2C, H*W) channel-major image; pe: (B, W, EMBED_DIM)
    B, c2, HW = x_chan.shape
    assert c2 == 2, "stand-in regularizer assumes in_chans == 2 (single coil)"
    W = pe.shape[1]
    emb = params["embedder"]
    reg = params["reg"]
    return pl.pallas_call(
        _reg_kernel,
        out_shape=jax.ShapeDtypeStruct((B, c2, HW), jnp.float32),
        grid=(B,),
        in_specs=[
            pl.BlockSpec((1, W, EMBED_DIM), lambda b: (b, 0, 0)),
            pl.BlockSpec((1, c2, HW), lambda b: (b, 0, 0)),
            _const_spec((EMBED_DIM, HIDDEN_EMB)),
            _const_spec((1, HIDDEN_EMB)),
            _const_spec((HIDDEN_EMB, EMBED_DIM)),
            _const_spec((1, EMBED_DIM)),
            _const_spec((1, EMBED_DIM)),
            _const_spec((1, EMBED_DIM)),
            _const_spec((REG_HIDDEN, EMBED_DIM)),
            _const_spec((REG_HIDDEN, 2)),
            _const_spec((REG_HIDDEN, 1)),
            _const_spec((REG_HIDDEN, 2)),
            _const_spec((1, 2)),
        ],
        out_specs=pl.BlockSpec((1, c2, HW), lambda b: (b, 0, 0)),
        compiler_params=pltpu.CompilerParams(
            dimension_semantics=("parallel",)),
    )(pe, x_chan, emb["w1"], emb["b1"], emb["w2"], emb["b2"],
      emb["ln_g"], emb["ln_b"], reg["wct"], reg["w1t"], reg["b1c"],
      reg["w2"], reg["b2"])


# ---------------------------------------------------------------------------
# Pallas kernel 2: fused soft data-consistency + MaskPredictor head
#   pred = model_term - dc_weight * mask * (model_term - ref_kspace)
#   prob = sigmoid(w0 * mean_H|re(pred)| + w1 * mean_H|im(pred)| + b)
# Grid over batch, parallel semantics; W on lanes (lane-dense at prod W).
# ---------------------------------------------------------------------------
def _dc_pred_kernel(mt_ref, rk_ref, m_ref, dcw_ref, pw_ref, pb_ref,
                    pred_ref, prob_ref, *, ch):
    mt = mt_ref[0]                                               # (2*C*H, W)
    pred = mt - dcw_ref[0] * m_ref[0] * (mt - rk_ref[0])         # soft DC
    pred_ref[0] = pred
    # ---- fused MaskPredictor head ----
    # TODO(synk): MaskPredictor definition not provided; implemented as the
    #             H-mean of |k-space| per (re, im) channel + linear + sigmoid.
    #             Its input is exactly pred_kspace because fft2c(ifft2c(x))
    #             is the identity, so no FFT round-trip is needed.
    aa = jnp.abs(pred)
    a_re = jnp.mean(aa[0:ch, :], axis=0, keepdims=True)          # (1, W)
    a_im = jnp.mean(aa[ch:, :], axis=0, keepdims=True)
    logits = pw_ref[0] * a_re + pw_ref[1] * a_im + pb_ref[0]
    prob_ref[0] = jax.nn.sigmoid(logits)                         # (1, W)


def dc_and_predict(mt_rows, ref_rows, mask_rows, params):
    # mt_rows / ref_rows: (B, 2*C*H, W) channel-major k-space views
    B, rows, W = mt_rows.shape
    ch = rows // 2
    return pl.pallas_call(
        partial(_dc_pred_kernel, ch=ch),
        out_shape=(jax.ShapeDtypeStruct((B, rows, W), jnp.float32),
                   jax.ShapeDtypeStruct((B, 1, W), jnp.float32)),
        grid=(B,),
        in_specs=[
            pl.BlockSpec((1, rows, W), lambda b: (b, 0, 0)),
            pl.BlockSpec((1, rows, W), lambda b: (b, 0, 0)),
            pl.BlockSpec((1, 1, W), lambda b: (b, 0, 0)),
            _smem_spec(), _smem_spec(), _smem_spec(),
        ],
        out_specs=(pl.BlockSpec((1, rows, W), lambda b: (b, 0, 0)),
                   pl.BlockSpec((1, 1, W), lambda b: (b, 0, 0))),
        compiler_params=pltpu.CompilerParams(
            dimension_semantics=("parallel",)),
    )(mt_rows, ref_rows, mask_rows,
      params["dc_weight"], params["predictor"]["w"], params["predictor"]["b"])


# ---------------------------------------------------------------------------
# PDAC mask update (argsort-based, plain JAX)
# ---------------------------------------------------------------------------
def update_mask(current_mask, pred_prob, add_num):
    # current_mask (B,1,1,W,1), pred_prob (B,W), add_num (B,)
    # TODO(synk): double-argsort ranking may break exact-probability ties
    #             differently from torch.argsort.
    mask_w = current_mask[:, 0, 0, :, 0]                         # (B, W)
    p = pred_prob * (1.0 - mask_w)
    order = jnp.argsort(-p, axis=-1)        # descending
    ranks = jnp.argsort(order, axis=-1)     # rank of each column
    add = (ranks < add_num[:, None]).astype(current_mask.dtype)
    new_mask_w = jnp.minimum(mask_w + add, 1.0)                  # bool-OR
    return new_mask_w[:, None, None, :, None]


# ---------------------------------------------------------------------------
# HUMUSNet_pdac_singlecoil forward
# ---------------------------------------------------------------------------
def humus_net_forward(masked_kspace, mask, params, num_list, num_cascades):
    B, C, H, W, two = masked_kspace.shape
    assert two == 2

    # channel-major working layout (B, 2C, H, W); built once (one transpose)
    kspace_chan = jnp.transpose(masked_kspace, (0, 4, 1, 2, 3)).reshape(
        B, 2 * C, H, W)
    # fixed DC reference and fixed acquisition mask (the PyTorch reference
    # also uses the original `mask` in every cascade's soft-DC term)
    ref_rows = kspace_chan.reshape(B, 2 * C * H, W)
    mask_rows = mask[:, :, 0, :, 0].astype(jnp.float32)          # (B, 1, W)

    current_mask = mask.astype(jnp.float32)                      # (B,1,1,W,1)
    current_prob = current_mask[:, 0, 0, :, 0]                   # (B, W)
    init_num = jnp.sum(current_prob, axis=-1)                    # (B,)
    actual = jnp.tile(jnp.asarray(num_list, jnp.float32)[None, :], (B, 1))
    actual = actual.at[:, 0].set(init_num)
    add_list = actual[:, 1:] - actual[:, :-1]

    kspace_out_set, inter_mask_set, inter_prob_set = [], [], []
    for i in range(num_cascades):
        # positional encoding of current probs (tiny, XLA); MLP fused in kernel
        pe = positional_encoding(current_prob)                   # (B, W, 66)

        # ---- VarNetBlock: ifft2c -> (norm + regularizer + unnorm) -> fft2c
        img_c = ifft2c_c(kspace_chan[:, :C] + 1j * kspace_chan[:, C:])
        x_chan = jnp.concatenate([jnp.real(img_c), jnp.imag(img_c)],
                                 axis=1).reshape(B, 2 * C, H * W)
        y = apply_model(x_chan.astype(jnp.float32), pe, params)  # (B, 2C, HW)
        y = y.reshape(B, 2 * C, H, W)
        model_c = fft2c_c(y[:, :C] + 1j * y[:, C:])
        mt_rows = jnp.concatenate(
            [jnp.real(model_c), jnp.imag(model_c)], axis=1
        ).reshape(B, 2 * C * H, W).astype(jnp.float32)

        # ---- fused soft data consistency + mask predictor ----
        pred_rows, prob3 = dc_and_predict(mt_rows, ref_rows, mask_rows, params)
        pred_chan = pred_rows.reshape(B, 2 * C, H, W)
        pred_prob = prob3[:, 0, :]                               # (B, W)

        kspace_out_set.append(pred_chan.reshape(B, 2, C, H, W))

        # ---- PDAC mask update ----
        current_mask = update_mask(current_mask, pred_prob, add_list[:, i])
        kspace_chan = pred_chan * current_mask[..., 0]           # (B,1,1,W) bc
        current_prob = pred_prob * current_mask[:, 0, 0, :, 0]
        # num_adj_slices == 1 -> chunk / center-slice selection is identity
        inter_mask_set.append(current_mask)
        inter_prob_set.append(current_prob)

    img_c = ifft2c_c(kspace_chan[:, :C] + 1j * kspace_chan[:, C:])
    out = jnp.sqrt(jnp.sum(jnp.abs(img_c) ** 2, axis=1))         # rss(|.|)

    kspace_out = jnp.transpose(jnp.stack(kspace_out_set, axis=1),
                               (0, 1, 3, 4, 5, 2))               # (B,nc,C,H,W,2)
    return (out, kspace_out,
            jnp.stack(inter_mask_set, axis=1),
            jnp.stack(inter_prob_set, axis=1))


# ---------------------------------------------------------------------------
# deterministic parameter init (synthetic, no checkpoint loading)
# ---------------------------------------------------------------------------
def init_params(key):
    ks = jax.random.split(key, 8)
    s = 0.02
    n = lambda k, shp: (s * jax.random.normal(k, shp)).astype(jnp.float32)
    return {
        "embedder": {
            "w1": n(ks[0], (EMBED_DIM, HIDDEN_EMB)),
            "b1": jnp.zeros((1, HIDDEN_EMB), jnp.float32),
            "w2": n(ks[1], (HIDDEN_EMB, EMBED_DIM)),
            "b2": jnp.zeros((1, EMBED_DIM), jnp.float32),
            "ln_g": jnp.ones((1, EMBED_DIM), jnp.float32),
            "ln_b": jnp.zeros((1, EMBED_DIM), jnp.float32),
        },
        "reg": {
            "wct": n(ks[2], (REG_HIDDEN, EMBED_DIM)),   # cond proj, stored (32,66)
            "w1t": n(ks[3], (REG_HIDDEN, 2)),           # in_chans = 2*num_adj_slices
            "b1c": jnp.zeros((REG_HIDDEN, 1), jnp.float32),
            "w2": n(ks[4], (REG_HIDDEN, 2)),
            "b2": jnp.zeros((1, 2), jnp.float32),
        },
        "dc_weight": jnp.ones((1,), jnp.float32),       # SMEM scalar
        "predictor": {
            "w": n(ks[5], (2,)),                        # SMEM
            "b": jnp.zeros((1,), jnp.float32),          # SMEM
        },
    }


if __name__ == "__main__":
    B, C, H, W = 2, 1, 16, 16          # singlecoil, num_adj_slices = 1
    key = jax.random.PRNGKey(0)
    k_data, k_param = jax.random.split(key)

    # deterministic inputs
    kspace_full = jax.random.normal(k_data, (B, C, H, W, 2), jnp.float32)
    mask_cols = jnp.zeros((W,), jnp.float32).at[jnp.array([6, 7, 8, 9])].set(1.0)
    mask = jnp.broadcast_to(mask_cols[None, None, None, :, None],
                            (B, 1, 1, W, 1))
    masked_kspace = kspace_full * mask

    params = init_params(k_param)

    fwd = jax.jit(partial(humus_net_forward,
                          num_list=NUM_LIST, num_cascades=NUM_CASCADES))
    out, kspace_out_set, inter_mask_set, inter_prob_set = jax.block_until_ready(
        fwd(masked_kspace, mask, params))

    assert out.shape == (B, H, W)
    assert kspace_out_set.shape == (B, NUM_CASCADES, C, H, W, 2)
    assert inter_mask_set.shape == (B, NUM_CASCADES, 1, 1, W, 1)
    assert inter_prob_set.shape == (B, NUM_CASCADES, W)
    assert bool(jnp.all(jnp.isfinite(out)))
    print("KERNEL_OK")
</pallas_src>

<mosaic_0001>
module attributes {stable_mosaic.version = 11 : i64} {
  func.func @_reg_kernel(%arg0: i32, %arg1: memref<1x16x66xf32, #tpu.memory_space<vmem>>, %arg2: memref<1x2x256xf32, #tpu.memory_space<vmem>>, %arg3: memref<66x264xf32, #tpu.memory_space<vmem>>, %arg4: memref<1x264xf32, #tpu.memory_space<vmem>>, %arg5: memref<264x66xf32, #tpu.memory_space<vmem>>, %arg6: memref<1x66xf32, #tpu.memory_space<vmem>>, %arg7: memref<1x66xf32, #tpu.memory_space<vmem>>, %arg8: memref<1x66xf32, #tpu.memory_space<vmem>>, %arg9: memref<32x66xf32, #tpu.memory_space<vmem>>, %arg10: memref<32x2xf32, #tpu.memory_space<vmem>>, %arg11: memref<32x1xf32, #tpu.memory_space<vmem>>, %arg12: memref<32x2xf32, #tpu.memory_space<vmem>>, %arg13: memref<1x2xf32, #tpu.memory_space<vmem>>, %arg14: memref<1x2x256xf32, #tpu.memory_space<vmem>>) attributes {dimension_semantics = [#tpu.dimension_semantics<parallel>], iteration_bounds = array<i64: 2>, scalar_prefetch = 0 : i64, scratch_operands = 0 : i64, tpu.core_type = #tpu.core_type<tc>, window_params = [{transform_indices = @transform_0, window_bounds = array<i64: 1, 16, 66>}, {transform_indices = @transform_1, window_bounds = array<i64: 1, 2, 256>}, {pipeline_mode = #tpu.pipeline_mode<synchronous>, transform_indices = @transform_2, window_bounds = array<i64: 66, 264>}, {pipeline_mode = #tpu.pipeline_mode<synchronous>, transform_indices = @transform_3, window_bounds = array<i64: 1, 264>}, {pipeline_mode = #tpu.pipeline_mode<synchronous>, transform_indices = @transform_4, window_bounds = array<i64: 264, 66>}, {pipeline_mode = #tpu.pipeline_mode<synchronous>, transform_indices = @transform_5, window_bounds = array<i64: 1, 66>}, {pipeline_mode = #tpu.pipeline_mode<synchronous>, transform_indices = @transform_6, window_bounds = array<i64: 1, 66>}, {pipeline_mode = #tpu.pipeline_mode<synchronous>, transform_indices = @transform_7, window_bounds = array<i64: 1, 66>}, {pipeline_mode = #tpu.pipeline_mode<synchronous>, transform_indices = @transform_8, window_bounds = array<i64: 32, 66>}, {pipeline_mode = #tpu.pipeline_mode<synchronous>, transform_indices = @transform_9, window_bounds = array<i64: 32, 2>}, {pipeline_mode = #tpu.pipeline_mode<synchronous>, transform_indices = @transform_10, window_bounds = array<i64: 32, 1>}, {pipeline_mode = #tpu.pipeline_mode<synchronous>, transform_indices = @transform_11, window_bounds = array<i64: 32, 2>}, {pipeline_mode = #tpu.pipeline_mode<synchronous>, transform_indices = @transform_12, window_bounds = array<i64: 1, 2>}, {transform_indices = @transform_13, window_bounds = array<i64: 1, 2, 256>}]} {
    %c0 = arith.constant 0 : index
    %c0_0 = arith.constant 0 : index
    %c0_1 = arith.constant 0 : index
    %0 = vector.load %arg1[%c0, %c0_0, %c0_1] : memref<1x16x66xf32, #tpu.memory_space<vmem>>, vector<1x16x66xf32>
    %1 = vector.shape_cast %0 : vector<1x16x66xf32> to vector<16x66xf32>
    %c0_2 = arith.constant 0 : index
    %c0_3 = arith.constant 0 : index
    %2 = vector.load %arg3[%c0_2, %c0_3] : memref<66x264xf32, #tpu.memory_space<vmem>>, vector<66x264xf32>
    %cst = arith.constant dense<0.000000e+00> : vector<16x264xf32>
    %3 = tpu.matmul %1, %2, %cst {dimension_numbers = #tpu.dot_dimension_numbers<[1], [0], [0], [1], [0, 0, 1, 1], [], []>} : vector<16x66xf32>, vector<66x264xf32>, vector<16x264xf32> -> vector<16x264xf32>
    %c0_4 = arith.constant 0 : index
    %c0_5 = arith.constant 0 : index
    %4 = vector.load %arg4[%c0_4, %c0_5] : memref<1x264xf32, #tpu.memory_space<vmem>>, vector<1x264xf32>
    %5 = vector.broadcast %4 : vector<1x264xf32> to vector<16x264xf32>
    %6 = arith.addf %3, %5 : vector<16x264xf32>
    %7 = arith.negf %6 : vector<16x264xf32>
    %8 = math.exp %7 : vector<16x264xf32>
    %cst_6 = arith.constant 1.000000e+00 : f32
    %9 = vector.broadcast %cst_6 : f32 to vector<16x264xf32>
    %10 = arith.addf %9, %8 : vector<16x264xf32>
    %11 = arith.divf %9, %10 : vector<16x264xf32>
    %12 = arith.mulf %6, %11 : vector<16x264xf32>
    %c0_7 = arith.constant 0 : index
    %c0_8 = arith.constant 0 : index
    %13 = vector.load %arg5[%c0_7, %c0_8] : memref<264x66xf32, #tpu.memory_space<vmem>>, vector<264x66xf32>
    %cst_9 = arith.constant dense<0.000000e+00> : vector<16x66xf32>
    %14 = tpu.matmul %12, %13, %cst_9 {dimension_numbers = #tpu.dot_dimension_numbers<[1], [0], [0], [1], [0, 0, 1, 1], [], []>} : vector<16x264xf32>, vector<264x66xf32>, vector<16x66xf32> -> vector<16x66xf32>
    %c0_10 = arith.constant 0 : index
    %c0_11 = arith.constant 0 : index
    %15 = vector.load %arg6[%c0_10, %c0_11] : memref<1x66xf32, #tpu.memory_space<vmem>>, vector<1x66xf32>
    %16 = vector.broadcast %15 : vector<1x66xf32> to vector<16x66xf32>
    %17 = arith.addf %14, %16 : vector<16x66xf32>
    %cst_12 = arith.constant dense<0.000000e+00> : vector<16xf32>
    %18 = vector.multi_reduction <add>, %17, %cst_12 [1] : vector<16x66xf32> to vector<16xf32>
    %19 = vector.shape_cast %18 : vector<16xf32> to vector<16x1xf32>
    %cst_13 = arith.constant 6.600000e+01 : f32
    %20 = vector.broadcast %cst_13 : f32 to vector<16x1xf32>
    %21 = arith.divf %19, %20 : vector<16x1xf32>
    %22 = vector.broadcast %21 : vector<16x1xf32> to vector<16x66xf32>
    %23 = arith.subf %17, %22 : vector<16x66xf32>
    %24 = arith.mulf %23, %23 : vector<16x66xf32>
    %cst_14 = arith.constant dense<0.000000e+00> : vector<16xf32>
    %25 = vector.multi_reduction <add>, %24, %cst_14 [1] : vector<16x66xf32> to vector<16xf32>
    %26 = vector.shape_cast %25 : vector<16xf32> to vector<16x1xf32>
    %cst_15 = arith.constant 6.600000e+01 : f32
    %27 = vector.broadcast %cst_15 : f32 to vector<16x1xf32>
    %28 = arith.divf %26, %27 : vector<16x1xf32>
    %29 = vector.broadcast %21 : vector<16x1xf32> to vector<16x66xf32>
    %30 = arith.subf %17, %29 : vector<16x66xf32>
    %cst_16 = arith.constant 9.99999974E-6 : f32
    %31 = vector.broadcast %cst_16 : f32 to vector<16x1xf32>
    %32 = arith.addf %28, %31 : vector<16x1xf32>
    %33 = math.rsqrt %32 : vector<16x1xf32>
    %34 = vector.broadcast %33 : vector<16x1xf32> to vector<16x66xf32>
    %35 = arith.mulf %30, %34 : vector<16x66xf32>
    %c0_17 = arith.constant 0 : index
    %c0_18 = arith.constant 0 : index
    %36 = vector.load %arg7[%c0_17, %c0_18] : memref<1x66xf32, #tpu.memory_space<vmem>>, vector<1x66xf32>
    %37 = vector.broadcast %36 : vector<1x66xf32> to vector<16x66xf32>
    %38 = arith.mulf %35, %37 : vector<16x66xf32>
    %c0_19 = arith.constant 0 : index
    %c0_20 = arith.constant 0 : index
    %39 = vector.load %arg8[%c0_19, %c0_20] : memref<1x66xf32, #tpu.memory_space<vmem>>, vector<1x66xf32>
    %40 = vector.broadcast %39 : vector<1x66xf32> to vector<16x66xf32>
    %41 = arith.addf %38, %40 : vector<16x66xf32>
    %cst_21 = arith.constant dense<0.000000e+00> : vector<66xf32>
    %42 = vector.multi_reduction <add>, %41, %cst_21 [0] : vector<16x66xf32> to vector<66xf32>
    %43 = vector.shape_cast %42 : vector<66xf32> to vector<1x66xf32>
    %cst_22 = arith.constant 1.600000e+01 : f32
    %44 = vector.broadcast %cst_22 : f32 to vector<1x66xf32>
    %45 = arith.divf %43, %44 : vector<1x66xf32>
    %c0_23 = arith.constant 0 : index
    %c0_24 = arith.constant 0 : index
    %46 = vector.load %arg9[%c0_23, %c0_24] : memref<32x66xf32, #tpu.memory_space<vmem>>, vector<32x66xf32>
    %47 = vector.broadcast %45 : vector<1x66xf32> to vector<32x66xf32>
    %48 = arith.mulf %46, %47 : vector<32x66xf32>
    %cst_25 = arith.constant dense<0.000000e+00> : vector<32xf32>
    %49 = vector.multi_reduction <add>, %48, %cst_25 [1] : vector<32x66xf32> to vector<32xf32>
    %50 = vector.shape_cast %49 : vector<32xf32> to vector<32x1xf32>
    %c0_26 = arith.constant 0 : index
    %c0_27 = arith.constant 0 : index
    %c0_28 = arith.constant 0 : index
    %51 = vector.load %arg2[%c0_26, %c0_27, %c0_28] : memref<1x2x256xf32, #tpu.memory_space<vmem>>, vector<1x2x256xf32>
    %52 = vector.shape_cast %51 : vector<1x2x256xf32> to vector<2x256xf32>
    %cst_29 = arith.constant dense<0.000000e+00> : vector<2xf32>
    %53 = vector.multi_reduction <add>, %52, %cst_29 [1] : vector<2x256xf32> to vector<2xf32>
    %54 = vector.shape_cast %53 : vector<2xf32> to vector<2x1xf32>
    %cst_30 = arith.constant 2.560000e+02 : f32
    %55 = vector.broadcast %cst_30 : f32 to vector<2x1xf32>
    %56 = arith.divf %54, %55 : vector<2x1xf32>
    %57 = vector.broadcast %56 : vector<2x1xf32> to vector<2x256xf32>
    %58 = arith.subf %52, %57 : vector<2x256xf32>
    %59 = arith.mulf %58, %58 : vector<2x256xf32>
    %cst_31 = arith.constant dense<0.000000e+00> : vector<2xf32>
    %60 = vector.multi_reduction <add>, %59, %cst_31 [1] : vector<2x256xf32> to vector<2xf32>
    %61 = vector.shape_cast %60 : vector<2xf32> to vector<2x1xf32>
    %cst_32 = arith.constant 2.550000e+02 : f32
    %62 = vector.broadcast %cst_32 : f32 to vector<2x1xf32>
    %63 = arith.divf %61, %62 : vector<2x1xf32>
    %64 = math.sqrt %63 : vector<2x1xf32>
    %cst_33 = arith.constant 9.99999997E-7 : f32
    %65 = vector.broadcast %cst_33 : f32 to vector<2x1xf32>
    %66 = arith.maximumf %64, %65 : vector<2x1xf32>
    %67 = vector.broadcast %56 : vector<2x1xf32> to vector<2x256xf32>
    %68 = arith.subf %52, %67 : vector<2x256xf32>
    %69 = vector.broadcast %66 : vector<2x1xf32> to vector<2x256xf32>
    %70 = arith.divf %68, %69 : vector<2x256xf32>
    %71 = vector.extract_strided_slice %70 {offsets = [0, 0], sizes = [1, 256], strides = [1, 1]} : vector<2x256xf32> to vector<1x256xf32>
    %c0_34 = arith.constant 0 : index
    %c0_35 = arith.constant 0 : index
    %72 = vector.load %arg10[%c0_34, %c0_35] : memref<32x2xf32, #tpu.memory_space<vmem>>, vector<32x1xf32>
    %73 = vector.broadcast %71 : vector<1x256xf32> to vector<32x256xf32>
    %74 = vector.broadcast %72 : vector<32x1xf32> to vector<32x256xf32>
    %75 = arith.mulf %73, %74 : vector<32x256xf32>
    %76 = vector.extract_strided_slice %70 {offsets = [1, 0], sizes = [1, 256], strides = [1, 1]} : vector<2x256xf32> to vector<1x256xf32>
    %c0_36 = arith.constant 0 : index
    %c1 = arith.constant 1 : index
    %77 = vector.load %arg10[%c0_36, %c1] : memref<32x2xf32, #tpu.memory_space<vmem>>, vector<32x1xf32>
    %78 = vector.broadcast %76 : vector<1x256xf32> to vector<32x256xf32>
    %79 = vector.broadcast %77 : vector<32x1xf32> to vector<32x256xf32>
    %80 = arith.mulf %78, %79 : vector<32x256xf32>
    %81 = arith.addf %75, %80 : vector<32x256xf32>
    %c0_37 = arith.constant 0 : index
    %c0_38 = arith.constant 0 : index
    %82 = vector.load %arg11[%c0_37, %c0_38] : memref<32x1xf32, #tpu.memory_space<vmem>>, vector<32x1xf32>
    %83 = vector.broadcast %82 : vector<32x1xf32> to vector<32x256xf32>
    %84 = arith.addf %81, %83 : vector<32x256xf32>
    %85 = vector.broadcast %50 : vector<32x1xf32> to vector<32x256xf32>
    %86 = arith.addf %84, %85 : vector<32x256xf32>
    %87 = arith.mulf %86, %86 : vector<32x256xf32>
    %88 = arith.mulf %86, %87 : vector<32x256xf32>
    %cst_39 = arith.constant 4.471500e-02 : f32
    %89 = vector.broadcast %cst_39 : f32 to vector<32x256xf32>
    %90 = arith.mulf %89, %88 : vector<32x256xf32>
    %91 = arith.addf %86, %90 : vector<32x256xf32>
    %cst_40 = arith.constant 0.797884583 : f32
    %92 = vector.broadcast %cst_40 : f32 to vector<32x256xf32>
    %93 = arith.mulf %92, %91 : vector<32x256xf32>
    %94 = math.tanh %93 : vector<32x256xf32>
    %cst_41 = arith.constant 1.000000e+00 : f32
    %95 = vector.broadcast %cst_41 : f32 to vector<32x256xf32>
    %96 = arith.addf %95, %94 : vector<32x256xf32>
    %cst_42 = arith.constant 5.000000e-01 : f32
    %97 = vector.broadcast %cst_42 : f32 to vector<32x256xf32>
    %98 = arith.mulf %97, %96 : vector<32x256xf32>
    %99 = arith.mulf %86, %98 : vector<32x256xf32>
    %c0_43 = arith.constant 0 : index
    %c0_44 = arith.constant 0 : index
    %100 = vector.load %arg12[%c0_43, %c0_44] : memref<32x2xf32, #tpu.memory_space<vmem>>, vector<32x1xf32>
    %101 = vector.broadcast %100 : vector<32x1xf32> to vector<32x256xf32>
    %102 = arith.mulf %99, %101 : vector<32x256xf32>
    %cst_45 = arith.constant dense<0.000000e+00> : vector<256xf32>
    %103 = vector.multi_reduction <add>, %102, %cst_45 [0] : vector<32x256xf32> to vector<256xf32>
    %104 = vector.shape_cast %103 : vector<256xf32> to vector<1x256xf32>
    %c0_46 = arith.constant 0 : index
    %c0_47 = arith.constant 0 : index
    %105 = vector.load %arg13[%c0_46, %c0_47] : memref<1x2xf32, #tpu.memory_space<vmem>>, vector<1x1xf32>
    %106 = vector.broadcast %105 : vector<1x1xf32> to vector<1x256xf32>
    %107 = arith.addf %104, %106 : vector<1x256xf32>
    %c0_48 = arith.constant 0 : index
    %c1_49 = arith.constant 1 : index
    %108 = vector.load %arg12[%c0_48, %c1_49] : memref<32x2xf32, #tpu.memory_space<vmem>>, vector<32x1xf32>
    %109 = vector.broadcast %108 : vector<32x1xf32> to vector<32x256xf32>
    %110 = arith.mulf %99, %109 : vector<32x256xf32>
    %cst_50 = arith.constant dense<0.000000e+00> : vector<256xf32>
    %111 = vector.multi_reduction <add>, %110, %cst_50 [0] : vector<32x256xf32> to vector<256xf32>
    %112 = vector.shape_cast %111 : vector<256xf32> to vector<1x256xf32>
    %c0_51 = arith.constant 0 : index
    %c1_52 = arith.constant 1 : index
    %113 = vector.load %arg13[%c0_51, %c1_52] : memref<1x2xf32, #tpu.memory_space<vmem>>, vector<1x1xf32>
    %114 = vector.broadcast %113 : vector<1x1xf32> to vector<1x256xf32>
    %115 = arith.addf %112, %114 : vector<1x256xf32>
    %116 = tpu.concatenate %107, %115 in 0 : vector<1x256xf32>, vector<1x256xf32> -> vector<2x256xf32>
    %117 = arith.addf %70, %116 : vector<2x256xf32>
    %118 = vector.broadcast %66 : vector<2x1xf32> to vector<2x256xf32>
    %119 = arith.mulf %117, %118 : vector<2x256xf32>
    %120 = vector.broadcast %56 : vector<2x1xf32> to vector<2x256xf32>
    %121 = arith.addf %119, %120 : vector<2x256xf32>
    %c0_53 = arith.constant 0 : index
    %c0_54 = arith.constant 0 : index
    %c0_55 = arith.constant 0 : index
    %122 = vector.load %arg14[%c0_53, %c0_54, %c0_55] : memref<1x2x256xf32, #tpu.memory_space<vmem>>, vector<1x2x256xf32>
    %123 = vector.shape_cast %122 : vector<1x2x256xf32> to vector<2x256xf32>
    %124 = vector.shape_cast %121 : vector<2x256xf32> to vector<1x2x256xf32>
    tpu.vector_store %arg14[%c0_53, %c0_54, %c0_55], %124 {strides = array<i32>} : memref<1x2x256xf32, #tpu.memory_space<vmem>>, vector<1x2x256xf32>,
    return
  }
  func.func @transform_0(%arg0: i32) -> (i32, i32, i32) {
    %c0_i32 = arith.constant 0 : i32
    %c0_i32_0 = arith.constant 0 : i32
    %c0_i32_1 = arith.constant 0 : i32
    return %arg0, %c0_i32, %c0_i32_0 : i32, i32, i32
  }
  func.func @transform_1(%arg0: i32) -> (i32, i32, i32) {
    %c0_i32 = arith.constant 0 : i32
    %c0_i32_0 = arith.constant 0 : i32
    %c0_i32_1 = arith.constant 0 : i32
    return %arg0, %c0_i32, %c0_i32_0 : i32, i32, i32
  }
  func.func @transform_2(%arg0: i32) -> (i32, i32) {
    %c0_i32 = arith.constant 0 : i32
    %c0_i32_0 = arith.constant 0 : i32
    %c0_i32_1 = arith.constant 0 : i32
    return %c0_i32, %c0_i32_0 : i32, i32
  }
  func.func @transform_3(%arg0: i32) -> (i32, i32) {
    %c0_i32 = arith.constant 0 : i32
    %c0_i32_0 = arith.constant 0 : i32
    %c0_i32_1 = arith.constant 0 : i32
    return %c0_i32, %c0_i32_0 : i32, i32
  }
  func.func @transform_4(%arg0: i32) -> (i32, i32) {
    %c0_i32 = arith.constant 0 : i32
    %c0_i32_0 = arith.constant 0 : i32
    %c0_i32_1 = arith.constant 0 : i32
    return %c0_i32, %c0_i32_0 : i32, i32
  }
  func.func @transform_5(%arg0: i32) -> (i32, i32) {
    %c0_i32 = arith.constant 0 : i32
    %c0_i32_0 = arith.constant 0 : i32
    %c0_i32_1 = arith.constant 0 : i32
    return %c0_i32, %c0_i32_0 : i32, i32
  }
  func.func @transform_6(%arg0: i32) -> (i32, i32) {
    %c0_i32 = arith.constant 0 : i32
    %c0_i32_0 = arith.constant 0 : i32
    %c0_i32_1 = arith.constant 0 : i32
    return %c0_i32, %c0_i32_0 : i32, i32
  }
  func.func @transform_7(%arg0: i32) -> (i32, i32) {
    %c0_i32 = arith.constant 0 : i32
    %c0_i32_0 = arith.constant 0 : i32
    %c0_i32_1 = arith.constant 0 : i32
    return %c0_i32, %c0_i32_0 : i32, i32
  }
  func.func @transform_8(%arg0: i32) -> (i32, i32) {
    %c0_i32 = arith.constant 0 : i32
    %c0_i32_0 = arith.constant 0 : i32
    %c0_i32_1 = arith.constant 0 : i32
    return %c0_i32, %c0_i32_0 : i32, i32
  }
  func.func @transform_9(%arg0: i32) -> (i32, i32) {
    %c0_i32 = arith.constant 0 : i32
    %c0_i32_0 = arith.constant 0 : i32
    %c0_i32_1 = arith.constant 0 : i32
    return %c0_i32, %c0_i32_0 : i32, i32
  }
  func.func @transform_10(%arg0: i32) -> (i32, i32) {
    %c0_i32 = arith.constant 0 : i32
    %c0_i32_0 = arith.constant 0 : i32
    %c0_i32_1 = arith.constant 0 : i32
    return %c0_i32, %c0_i32_0 : i32, i32
  }
  func.func @transform_11(%arg0: i32) -> (i32, i32) {
    %c0_i32 = arith.constant 0 : i32
    %c0_i32_0 = arith.constant 0 : i32
    %c0_i32_1 = arith.constant 0 : i32
    return %c0_i32, %c0_i32_0 : i32, i32
  }
  func.func @transform_12(%arg0: i32) -> (i32, i32) {
    %c0_i32 = arith.constant 0 : i32
    %c0_i32_0 = arith.constant 0 : i32
    %c0_i32_1 = arith.constant 0 : i32
    return %c0_i32, %c0_i32_0 : i32, i32
  }
  func.func @transform_13(%arg0: i32) -> (i32, i32, i32) {
    %c0_i32 = arith.constant 0 : i32
    %c0_i32_0 = arith.constant 0 : i32
    %c0_i32_1 = arith.constant 0 : i32
    return %arg0, %c0_i32, %c0_i32_0 : i32, i32, i32
  }
}

module attributes {stable_mosaic.version = 11 : i64} {
  func.func @_dc_pred_kernel(%arg0: i32, %arg1: memref<1x32x16xf32, #tpu.memory_space<vmem>>, %arg2: memref<1x32x16xf32, #tpu.memory_space<vmem>>, %arg3: memref<1x1x16xf32, #tpu.memory_space<vmem>>, %arg4: memref<1xf32, #tpu.memory_space<smem>>, %arg5: memref<2xf32, #tpu.memory_space<smem>>, %arg6: memref<1xf32, #tpu.memory_space<smem>>, %arg7: memref<1x32x16xf32, #tpu.memory_space<vmem>>, %arg8: memref<1x1x16xf32, #tpu.memory_space<vmem>>) attributes {dimension_semantics = [#tpu.dimension_semantics<parallel>], iteration_bounds = array<i64: 2>, scalar_prefetch = 0 : i64, scratch_operands = 0 : i64, tpu.core_type = #tpu.core_type<tc>, window_params = [{transform_indices = @transform_0, window_bounds = array<i64: 1, 32, 16>}, {transform_indices = @transform_1, window_bounds = array<i64: 1, 32, 16>}, {transform_indices = @transform_2, window_bounds = array<i64: 1, 1, 16>}, {transform_indices = @transform_3, window_bounds = array<i64: 1>}, {transform_indices = @transform_4, window_bounds = array<i64: 2>}, {transform_indices = @transform_5, window_bounds = array<i64: 1>}, {transform_indices = @transform_6, window_bounds = array<i64: 1, 32, 16>}, {transform_indices = @transform_7, window_bounds = array<i64: 1, 1, 16>}]} {
    %c0 = arith.constant 0 : index
    %c0_0 = arith.constant 0 : index
    %c0_1 = arith.constant 0 : index
    %0 = vector.load %arg1[%c0, %c0_0, %c0_1] : memref<1x32x16xf32, #tpu.memory_space<vmem>>, vector<1x32x16xf32>
    %1 = vector.shape_cast %0 : vector<1x32x16xf32> to vector<32x16xf32>
    %c0_2 = arith.constant 0 : index
    %2 = memref.load %arg4[%c0_2] : memref<1xf32, #tpu.memory_space<smem>>
    %c0_3 = arith.constant 0 : index
    %c0_4 = arith.constant 0 : index
    %c0_5 = arith.constant 0 : index
    %3 = vector.load %arg3[%c0_3, %c0_4, %c0_5] : memref<1x1x16xf32, #tpu.memory_space<vmem>>, vector<1x1x16xf32>
    %4 = vector.shape_cast %3 : vector<1x1x16xf32> to vector<1x16xf32>
    %5 = vector.broadcast %2 : f32 to vector<1x16xf32>
    %6 = arith.mulf %5, %4 : vector<1x16xf32>
    %c0_6 = arith.constant 0 : index
    %c0_7 = arith.constant 0 : index
    %c0_8 = arith.constant 0 : index
    %7 = vector.load %arg2[%c0_6, %c0_7, %c0_8] : memref<1x32x16xf32, #tpu.memory_space<vmem>>, vector<1x32x16xf32>
    %8 = vector.shape_cast %7 : vector<1x32x16xf32> to vector<32x16xf32>
    %9 = arith.subf %1, %8 : vector<32x16xf32>
    %10 = vector.broadcast %6 : vector<1x16xf32> to vector<32x16xf32>
    %11 = arith.mulf %10, %9 : vector<32x16xf32>
    %12 = arith.subf %1, %11 : vector<32x16xf32>
    %c0_9 = arith.constant 0 : index
    %c0_10 = arith.constant 0 : index
    %c0_11 = arith.constant 0 : index
    %13 = vector.load %arg7[%c0_9, %c0_10, %c0_11] : memref<1x32x16xf32, #tpu.memory_space<vmem>>, vector<1x32x16xf32>
    %14 = vector.shape_cast %13 : vector<1x32x16xf32> to vector<32x16xf32>
    %15 = vector.shape_cast %12 : vector<32x16xf32> to vector<1x32x16xf32>
    tpu.vector_store %arg7[%c0_9, %c0_10, %c0_11], %15 {strides = array<i32>} : memref<1x32x16xf32, #tpu.memory_space<vmem>>, vector<1x32x16xf32>,
    %16 = math.absf %12 : vector<32x16xf32>
    %17 = vector.extract_strided_slice %16 {offsets = [0, 0], sizes = [16, 16], strides = [1, 1]} : vector<32x16xf32> to vector<16x16xf32>
    %cst = arith.constant dense<0.000000e+00> : vector<16xf32>
    %18 = vector.multi_reduction <add>, %17, %cst [0] : vector<16x16xf32> to vector<16xf32>
    %19 = vector.shape_cast %18 : vector<16xf32> to vector<1x16xf32>
    %cst_12 = arith.constant 1.600000e+01 : f32
    %20 = vector.broadcast %cst_12 : f32 to vector<1x16xf32>
    %21 = arith.divf %19, %20 : vector<1x16xf32>
    %22 = vector.extract_strided_slice %16 {offsets = [16, 0], sizes = [16, 16], strides = [1, 1]} : vector<32x16xf32> to vector<16x16xf32>
    %cst_13 = arith.constant dense<0.000000e+00> : vector<16xf32>
    %23 = vector.multi_reduction <add>, %22, %cst_13 [0] : vector<16x16xf32> to vector<16xf32>
    %24 = vector.shape_cast %23 : vector<16xf32> to vector<1x16xf32>
    %cst_14 = arith.constant 1.600000e+01 : f32
    %25 = vector.broadcast %cst_14 : f32 to vector<1x16xf32>
    %26 = arith.divf %24, %25 : vector<1x16xf32>
    %c0_15 = arith.constant 0 : index
    %27 = memref.load %arg5[%c0_15] : memref<2xf32, #tpu.memory_space<smem>>
    %28 = vector.broadcast %27 : f32 to vector<1x16xf32>
    %29 = arith.mulf %28, %21 : vector<1x16xf32>
    %c1 = arith.constant 1 : index
    %30 = memref.load %arg5[%c1] : memref<2xf32, #tpu.memory_space<smem>>
    %31 = vector.broadcast %30 : f32 to vector<1x16xf32>
    %32 = arith.mulf %31, %26 : vector<1x16xf32>
    %33 = arith.addf %29, %32 : vector<1x16xf32>
    %c0_16 = arith.constant 0 : index
    %34 = memref.load %arg6[%c0_16] : memref<1xf32, #tpu.memory_space<smem>>
    %35 = vector.broadcast %34 : f32 to vector<1x16xf32>
    %36 = arith.addf %33, %35 : vector<1x16xf32>
    %37 = arith.negf %36 : vector<1x16xf32>
    %38 = math.exp %37 : vector<1x16xf32>
    %cst_17 = arith.constant 1.000000e+00 : f32
    %39 = vector.broadcast %cst_17 : f32 to vector<1x16xf32>
    %40 = arith.addf %39, %38 : vector<1x16xf32>
    %41 = arith.divf %39, %40 : vector<1x16xf32>
    %c0_18 = arith.constant 0 : index
    %c0_19 = arith.constant 0 : index
    %c0_20 = arith.constant 0 : index
    %42 = vector.load %arg8[%c0_18, %c0_19, %c0_20] : memref<1x1x16xf32, #tpu.memory_space<vmem>>, vector<1x1x16xf32>
    %43 = vector.shape_cast %42 : vector<1x1x16xf32> to vector<1x16xf32>
    %44 = vector.shape_cast %41 : vector<1x16xf32> to vector<1x1x16xf32>
    tpu.vector_store %arg8[%c0_18, %c0_19, %c0_20], %44 {strides = array<i32>} : memref<1x1x16xf32, #tpu.memory_space<vmem>>, vector<1x1x16xf32>,
    return
  }
  func.func @transform_0(%arg0: i32) -> (i32, i32, i32) {
    %c0_i32 = arith.constant 0 : i32
    %c0_i32_0 = arith.constant 0 : i32
    %c0_i32_1 = arith.constant 0 : i32
    return %arg0, %c0_i32, %c0_i32_0 : i32, i32, i32
  }
  func.func @transform_1(%arg0: i32) -> (i32, i32, i32) {
    %c0_i32 = arith.constant 0 : i32
    %c0_i32_0 = arith.constant 0 : i32
    %c0_i32_1 = arith.constant 0 : i32
    return %arg0, %c0_i32, %c0_i32_0 : i32, i32, i32
  }
  func.func @transform_2(%arg0: i32) -> (i32, i32, i32) {
    %c0_i32 = arith.constant 0 : i32
    %c0_i32_0 = arith.constant 0 : i32
    %c0_i32_1 = arith.constant 0 : i32
    return %arg0, %c0_i32, %c0_i32_0 : i32, i32, i32
  }
  func.func @transform_3(%arg0: i32) -> i32 {
    %c0_i32 = arith.constant 0 : i32
    %c0_i32_0 = arith.constant 0 : i32
    return %c0_i32 : i32
  }
  func.func @transform_4(%arg0: i32) -> i32 {
    %c0_i32 = arith.constant 0 : i32
    %c0_i32_0 = arith.constant 0 : i32
    return %c0_i32 : i32
  }
  func.func @transform_5(%arg0: i32) -> i32 {
    %c0_i32 = arith.constant 0 : i32
    %c0_i32_0 = arith.constant 0 : i32
    return %c0_i32 : i32
  }
  func.func @transform_6(%arg0: i32) -> (i32, i32, i32) {
    %c0_i32 = arith.constant 0 : i32
    %c0_i32_0 = arith.constant 0 : i32
    %c0_i32_1 = arith.constant 0 : i32
    return %arg0, %c0_i32, %c0_i32_0 : i32, i32, i32
  }
  func.func @transform_7(%arg0: i32) -> (i32, i32, i32) {
    %c0_i32 = arith.constant 0 : i32
    %c0_i32_0 = arith.constant 0 : i32
    %c0_i32_1 = arith.constant 0 : i32
    return %arg0, %c0_i32, %c0_i32_0 : i32, i32, i32
  }
}

</mosaic_0001>

<llo_original>
// kernel: humus_net_forward.4
$region0: #{humus_net_forward.4}
  #allocation0 [shape = 'u32[]', space=smem, size = 0x4, offset = 0x4, fixed_abs, tag = 'smem constant byte address 0x4 - core index']
  #allocation1 [shape = 'u32[144,128]{1,0:T(1,128)}', space=vmem, size = 0x12000, scoped, tag = 'internal scratch']
  %s0 = inlined_call_operand.vmem [shape: f32[2,16,66], index: 0, kind: input, shape index: {}]
  %s1 = inlined_call_operand.vmem [shape: f32[2,2,256], index: 1, kind: input, shape index: {}]
  %s2 = inlined_call_operand.vmem [shape: f32[66,264], index: 2, kind: input, shape index: {}]
  %s3 = inlined_call_operand.vmem [shape: f32[1,264], index: 3, kind: input, shape index: {}]
  %s4 = inlined_call_operand.vmem [shape: f32[264,66], index: 4, kind: input, shape index: {}]
  %s5 = inlined_call_operand.vmem [shape: f32[1,66], index: 5, kind: input, shape index: {}]
  %s6 = inlined_call_operand.vmem [shape: f32[1,66], index: 6, kind: input, shape index: {}]
  %s7 = inlined_call_operand.vmem [shape: f32[1,66], index: 7, kind: input, shape index: {}]
  %s8 = inlined_call_operand.vmem [shape: f32[32,66], index: 8, kind: input, shape index: {}]
  %s9 = inlined_call_operand.vmem [shape: f32[32,2], index: 9, kind: input, shape index: {}]
  %s10 = inlined_call_operand.vmem [shape: f32[32,1], index: 10, kind: input, shape index: {}]
  %s11 = inlined_call_operand.vmem [shape: f32[32,2], index: 11, kind: input, shape index: {}]
  %s12 = inlined_call_operand.vmem [shape: f32[1,2], index: 12, kind: input, shape index: {}]
  %s13 = inlined_call_operand.vmem [shape: f32[2,2,256], index: 13, kind: output, shape index: {}]
  %s14 = sld [smem:[#allocation0]]
  $region85: #{humus_net_forward.4} parent=0
    _
  %s16 = ssub.s32 1, %s14
  %s17 = scalar_select 0, %s16, %s14
  loop: start=0, step=1, limit=4
  $region2: #{humus_net_forward.4} parent=0 // loop_pre_header
    _
  $region3: #{humus_net_forward.4} parent=0 // loop_header
    %s19 = sphi 0, %s23
    %p20 = scmp.ge.s32.totalorder %s19, 4
    %s29 = sphi 0, %s31
    %s32 = sphi 0, %s29
    %s33 = sphi 0, %s32
    %s49 = sphi 0, %s33
    %s55 = sphi 0, %s57
    %s58 = sphi 0, %s55
    %s59 = sphi 0, %s58
    %s75 = sphi 0, %s59
    %s79 = sphi 0, %s79
    %s81 = sphi 0, %s79
    %s82 = sphi 0, %s81
    %s96 = sphi 0, %s82
    %s100 = sphi 0, %s100
    %s102 = sphi 0, %s100
    %s103 = sphi 0, %s102
    %s117 = sphi 0, %s103
    %s121 = sphi 0, %s121
    %s123 = sphi 0, %s121
    %s124 = sphi 0, %s123
    %s138 = sphi 0, %s124
    %s142 = sphi 0, %s142
    %s144 = sphi 0, %s142
    %s145 = sphi 0, %s144
    %s159 = sphi 0, %s145
    %s163 = sphi 0, %s163
    %s165 = sphi 0, %s163
    %s166 = sphi 0, %s165
    %s180 = sphi 0, %s166
    %s184 = sphi 0, %s184
    %s186 = sphi 0, %s184
    %s187 = sphi 0, %s186
    %s201 = sphi 0, %s187
    %s205 = sphi 0, %s205
    %s207 = sphi 0, %s205
    %s208 = sphi 0, %s207
    %s222 = sphi 0, %s208
    %s226 = sphi 0, %s226
    %s228 = sphi 0, %s226
    %s229 = sphi 0, %s228
    %s243 = sphi 0, %s229
    %s247 = sphi 0, %s247
    %s249 = sphi 0, %s247
    %s250 = sphi 0, %s249
    %s264 = sphi 0, %s250
    %s268 = sphi 0, %s268
    %s270 = sphi 0, %s268
    %s271 = sphi 0, %s270
    %s285 = sphi 0, %s271
    %s289 = sphi 0, %s289
    %s291 = sphi 0, %s289
    %s292 = sphi 0, %s291
    %s306 = sphi 0, %s292
    %s312 = sphi 0, %s314
    %s315 = sphi 0, %s312
    %s316 = sphi 0, %s315
    %s332 = sphi 0, %s316
  $region4: #{humus_net_forward.4} parent=0 // loop_header_branch
    %22 = sbr.rel (%p20) target = $region8
  $region5: #{humus_net_forward.4} parent=0 // loop_body
    %s24 = ssub.s32 %s19, 1
    %s25 = ssub.s32 %s19, 2
    %s26 = sadd.s32 %s19, 1
    %s27 = ssub.s32 %s19, %s26
    %p28 = scmp.eq.s32.totalorder %s27, 0
    %s30 = sadd.s32 %s29, 1
    %s31 = scalar_select %p28, %s29, %s30
    %p34 = pneg %p28
    %p35 = scmp.eq.s32.totalorder %s19, 1
    %p36 = por %p34, %p35
    %p37 = scmp.ne.s32.totalorder %s29, %s32
    %p38 = scmp.eq.s32.totalorder %s19, 0
    %p39 = por %p37, %p38
    %p40 = scmp.ne.s32.totalorder %s29, %s32
    %p41 = scmp.eq.s32.totalorder %s24, 1
    %p42 = por %p40, %p41
    %p43 = scmp.ne.s32.totalorder %s32, %s33
    %p44 = scmp.eq.s32.totalorder %s24, 0
    %p45 = por %p43, %p44
    %p46 = scmp.ne.s32.totalorder %s32, %s33
    %p47 = scmp.eq.s32.totalorder %s25, 1
    %p48 = por %p46, %p47
    %p50 = scmp.ne.s32.totalorder %s33, %s49
    %p51 = scmp.eq.s32.totalorder %s25, 0
    %p52 = por %p50, %p51
    %s53 = ssub.s32 %s19, %s26
    %p54 = scmp.eq.s32.totalorder %s53, 0
    %s56 = sadd.s32 %s55, 1
    %s57 = scalar_select %p54, %s55, %s56
    %p60 = pneg %p54
    %p61 = scmp.eq.s32.totalorder %s19, 1
    %p62 = por %p60, %p61
    %p63 = scmp.ne.s32.totalorder %s55, %s58
    %p64 = scmp.eq.s32.totalorder %s19, 0
    %p65 = por %p63, %p64
    %p66 = scmp.ne.s32.totalorder %s55, %s58
    %p67 = scmp.eq.s32.totalorder %s24, 1
    %p68 = por %p66, %p67
    %p69 = scmp.ne.s32.totalorder %s58, %s59
    %p70 = scmp.eq.s32.totalorder %s24, 0
    %p71 = por %p69, %p70
    %p72 = scmp.ne.s32.totalorder %s58, %s59
    %p73 = scmp.eq.s32.totalorder %s25, 1
    %p74 = por %p72, %p73
    %p76 = scmp.ne.s32.totalorder %s59, %s75
    %p77 = scmp.eq.s32.totalorder %s25, 0
    %p78 = por %p76, %p77
    %s80 = sadd.s32 %s79, 1
    %p83 = scmp.eq.s32.totalorder %s19, 1
    %p84 = scmp.ne.s32.totalorder %s79, %s81
    %p85 = scmp.eq.s32.totalorder %s19, 0
    %p86 = por %p84, %p85
    %p87 = scmp.ne.s32.totalorder %s79, %s81
    %p88 = scmp.eq.s32.totalorder %s24, 1
    %p89 = por %p87, %p88
    %p90 = scmp.ne.s32.totalorder %s81, %s82
    %p91 = scmp.eq.s32.totalorder %s24, 0
    %p92 = por %p90, %p91
    %p93 = scmp.ne.s32.totalorder %s81, %s82
    %p94 = scmp.eq.s32.totalorder %s25, 1
    %p95 = por %p93, %p94
    %p97 = scmp.ne.s32.totalorder %s82, %s96
    %p98 = scmp.eq.s32.totalorder %s25, 0
    %p99 = por %p97, %p98
    %s101 = sadd.s32 %s100, 1
    %p104 = scmp.eq.s32.totalorder %s19, 1
    %p105 = scmp.ne.s32.totalorder %s100, %s102
    %p106 = scmp.eq.s32.totalorder %s19, 0
    %p107 = por %p105, %p106
    %p108 = scmp.ne.s32.totalorder %s100, %s102
    %p109 = scmp.eq.s32.totalorder %s24, 1
    %p110 = por %p108, %p109
    %p111 = scmp.ne.s32.totalorder %s102, %s103
    %p112 = scmp.eq.s32.totalorder %s24, 0
    %p113 = por %p111, %p112
    %p114 = scmp.ne.s32.totalorder %s102, %s103
    %p115 = scmp.eq.s32.totalorder %s25, 1
    %p116 = por %p114, %p115
    %p118 = scmp.ne.s32.totalorder %s103, %s117
    %p119 = scmp.eq.s32.totalorder %s25, 0
    %p120 = por %p118, %p119
    %s122 = sadd.s32 %s121, 1
    %p125 = scmp.eq.s32.totalorder %s19, 1
    %p126 = scmp.ne.s32.totalorder %s121, %s123
    %p127 = scmp.eq.s32.totalorder %s19, 0
    %p128 = por %p126, %p127
    %p129 = scmp.ne.s32.totalorder %s121, %s123
    %p130 = scmp.eq.s32.totalorder %s24, 1
    %p131 = por %p129, %p130
    %p132 = scmp.ne.s32.totalorder %s123, %s124
    %p133 = scmp.eq.s32.totalorder %s24, 0
    %p134 = por %p132, %p133
    %p135 = scmp.ne.s32.totalorder %s123, %s124
    %p136 = scmp.eq.s32.totalorder %s25, 1
    %p137 = por %p135, %p136
    %p139 = scmp.ne.s32.totalorder %s124, %s138
    %p140 = scmp.eq.s32.totalorder %s25, 0
    %p141 = por %p139, %p140
    %s143 = sadd.s32 %s142, 1
    %p146 = scmp.eq.s32.totalorder %s19, 1
    %p147 = scmp.ne.s32.totalorder %s142, %s144
    %p148 = scmp.eq.s32.totalorder %s19, 0
    %p149 = por %p147, %p148
    %p150 = scmp.ne.s32.totalorder %s142, %s144
    %p151 = scmp.eq.s32.totalorder %s24, 1
    %p152 = por %p150, %p151
    %p153 = scmp.ne.s32.totalorder %s144, %s145
    %p154 = scmp.eq.s32.totalorder %s24, 0
    %p155 = por %p153, %p154
    %p156 = scmp.ne.s32.totalorder %s144, %s145
    %p157 = scmp.eq.s32.totalorder %s25, 1
    %p158 = por %p156, %p157
    %p160 = scmp.ne.s32.totalorder %s145, %s159
    %p161 = scmp.eq.s32.totalorder %s25, 0
    %p162 = por %p160, %p161
    %s164 = sadd.s32 %s163, 1
    %p167 = scmp.eq.s32.totalorder %s19, 1
    %p168 = scmp.ne.s32.totalorder %s163, %s165
    %p169 = scmp.eq.s32.totalorder %s19, 0
    %p170 = por %p168, %p169
    %p171 = scmp.ne.s32.totalorder %s163, %s165
    %p172 = scmp.eq.s32.totalorder %s24, 1
    %p173 = por %p171, %p172
    %p174 = scmp.ne.s32.totalorder %s165, %s166
    %p175 = scmp.eq.s32.totalorder %s24, 0
    %p176 = por %p174, %p175
    %p177 = scmp.ne.s32.totalorder %s165, %s166
    %p178 = scmp.eq.s32.totalorder %s25, 1
    %p179 = por %p177, %p178
    %p181 = scmp.ne.s32.totalorder %s166, %s180
    %p182 = scmp.eq.s32.totalorder %s25, 0
    %p183 = por %p181, %p182
    %s185 = sadd.s32 %s184, 1
    %p188 = scmp.eq.s32.totalorder %s19, 1
    %p189 = scmp.ne.s32.totalorder %s184, %s186
    %p190 = scmp.eq.s32.totalorder %s19, 0
    %p191 = por %p189, %p190
    %p192 = scmp.ne.s32.totalorder %s184, %s186
    %p193 = scmp.eq.s32.totalorder %s24, 1
    %p194 = por %p192, %p193
    %p195 = scmp.ne.s32.totalorder %s186, %s187
    %p196 = scmp.eq.s32.totalorder %s24, 0
    %p197 = por %p195, %p196
    %p198 = scmp.ne.s32.totalorder %s186, %s187
    %p199 = scmp.eq.s32.totalorder %s25, 1
    %p200 = por %p198, %p199
    %p202 = scmp.ne.s32.totalorder %s187, %s201
    %p203 = scmp.eq.s32.totalorder %s25, 0
    %p204 = por %p202, %p203
    %s206 = sadd.s32 %s205, 1
    %p209 = scmp.eq.s32.totalorder %s19, 1
    %p210 = scmp.ne.s32.totalorder %s205, %s207
    %p211 = scmp.eq.s32.totalorder %s19, 0
    %p212 = por %p210, %p211
    %p213 = scmp.ne.s32.totalorder %s205, %s207
    %p214 = scmp.eq.s32.totalorder %s24, 1
    %p215 = por %p213, %p214
    %p216 = scmp.ne.s32.totalorder %s207, %s208
    %p217 = scmp.eq.s32.totalorder %s24, 0
    %p218 = por %p216, %p217
    %p219 = scmp.ne.s32.totalorder %s207, %s208
    %p220 = scmp.eq.s32.totalorder %s25, 1
    %p221 = por %p219, %p220
    %p223 = scmp.ne.s32.totalorder %s208, %s222
    %p224 = scmp.eq.s32.totalorder %s25, 0
    %p225 = por %p223, %p224
    %s227 = sadd.s32 %s226, 1
    %p230 = scmp.eq.s32.totalorder %s19, 1
    %p231 = scmp.ne.s32.totalorder %s226, %s228
    %p232 = scmp.eq.s32.totalorder %s19, 0
    %p233 = por %p231, %p232
    %p234 = scmp.ne.s32.totalorder %s226, %s228
    %p235 = scmp.eq.s32.totalorder %s24, 1
    %p236 = por %p234, %p235
    %p237 = scmp.ne.s32.totalorder %s228, %s229
    %p238 = scmp.eq.s32.totalorder %s24, 0
    %p239 = por %p237, %p238
    %p240 = scmp.ne.s32.totalorder %s228, %s229
    %p241 = scmp.eq.s32.totalorder %s25, 1
    %p242 = por %p240, %p241
    %p244 = scmp.ne.s32.totalorder %s229, %s243
    %p245 = scmp.eq.s32.totalorder %s25, 0
    %p246 = por %p244, %p245
    %s248 = sadd.s32 %s247, 1
    %p251 = scmp.eq.s32.totalorder %s19, 1
    %p252 = scmp.ne.s32.totalorder %s247, %s249
    %p253 = scmp.eq.s32.totalorder %s19, 0
    %p254 = por %p252, %p253
    %p255 = scmp.ne.s32.totalorder %s247, %s249
    %p256 = scmp.eq.s32.totalorder %s24, 1
    %p257 = por %p255, %p256
    %p258 = scmp.ne.s32.totalorder %s249, %s250
    %p259 = scmp.eq.s32.totalorder %s24, 0
    %p260 = por %p258, %p259
    %p261 = scmp.ne.s32.totalorder %s249, %s250
    %p262 = scmp.eq.s32.totalorder %s25, 1
    %p263 = por %p261, %p262
    %p265 = scmp.ne.s32.totalorder %s250, %s264
    %p266 = scmp.eq.s32.totalorder %s25, 0
    %p267 = por %p265, %p266
    %s269 = sadd.s32 %s268, 1
    %p272 = scmp.eq.s32.totalorder %s19, 1
    %p273 = scmp.ne.s32.totalorder %s268, %s270
    %p274 = scmp.eq.s32.totalorder %s19, 0
    %p275 = por %p273, %p274
    %p276 = scmp.ne.s32.totalorder %s268, %s270
    %p277 = scmp.eq.s32.totalorder %s24, 1
    %p278 = por %p276, %p277
    %p279 = scmp.ne.s32.totalorder %s270, %s271
    %p280 = scmp.eq.s32.totalorder %s24, 0
    %p281 = por %p279, %p280
    %p282 = scmp.ne.s32.totalorder %s270, %s271
    %p283 = scmp.eq.s32.totalorder %s25, 1
    %p284 = por %p282, %p283
    %p286 = scmp.ne.s32.totalorder %s271, %s285
    %p287 = scmp.eq.s32.totalorder %s25, 0
    %p288 = por %p286, %p287
    %s290 = sadd.s32 %s289, 1
    %p293 = scmp.eq.s32.totalorder %s19, 1
    %p294 = scmp.ne.s32.totalorder %s289, %s291
    %p295 = scmp.eq.s32.totalorder %s19, 0
    %p296 = por %p294, %p295
    %p297 = scmp.ne.s32.totalorder %s289, %s291
    %p298 = scmp.eq.s32.totalorder %s24, 1
    %p299 = por %p297, %p298
    %p300 = scmp.ne.s32.totalorder %s291, %s292
    %p301 = scmp.eq.s32.totalorder %s24, 0
    %p302 = por %p300, %p301
    %p303 = scmp.ne.s32.totalorder %s291, %s292
    %p304 = scmp.eq.s32.totalorder %s25, 1
    %p305 = por %p303, %p304
    %p307 = scmp.ne.s32.totalorder %s292, %s306
    %p308 = scmp.eq.s32.totalorder %s25, 0
    %p309 = por %p307, %p308
    %s310 = ssub.s32 %s19, %s26
    %p311 = scmp.eq.s32.totalorder %s310, 0
    %s313 = sadd.s32 %s312, 1
    %s314 = scalar_select %p311, %s312, %s313
    %p317 = pneg %p311
    %p318 = scmp.eq.s32.totalorder %s19, 1
    %p319 = por %p317, %p318
    %p320 = scmp.ne.s32.totalorder %s312, %s315
    %p321 = scmp.eq.s32.totalorder %s19, 0
    %p322 = por %p320, %p321
    %p323 = scmp.ne.s32.totalorder %s312, %s315
    %p324 = scmp.eq.s32.totalorder %s24, 1
    %p325 = por %p323, %p324
    %p326 = scmp.ne.s32.totalorder %s315, %s316
    %p327 = scmp.eq.s32.totalorder %s24, 0
    %p328 = por %p326, %p327
    %p329 = scmp.ne.s32.totalorder %s315, %s316
    %p330 = scmp.eq.s32.totalorder %s25, 1
    %p331 = por %p329, %p330
    %p333 = scmp.ne.s32.totalorder %s316, %s332
    %p334 = scmp.eq.s32.totalorder %s25, 0
    %p335 = por %p333, %p334
    %p336 = scmp.le.s32.totalorder 1, %s19
    %p337 = scmp.lt.s32.totalorder %s19, 3
    %p338 = pnand %p336, %p337
    %p339 = pneg %p338
    // Predicated region
    $region9: #{humus_net_forward.4} parent=5 // pred_check
      _
    $region10: #{humus_net_forward.4} parent=5 // pred_check_branch
      %341 = sbr.rel (%p338) target = $region12
    $region11: #{humus_net_forward.4} parent=5 // pred_region
      %s342 = ssub.s32 %s19, 1
      // Predicated region
      $region13: #{humus_net_forward.4} parent=11 // pred_check
        %p343 = pneg %p92
      $region14: #{humus_net_forward.4} parent=11 // pred_check_branch
        %345 = sbr.rel (%p343) target = $region16
      $region15: #{humus_net_forward.4} parent=11 // pred_region
        _
      $region16: #{humus_net_forward.4} parent=11 // pred_fallthru
        _
      // Predicated region
      $region17: #{humus_net_forward.4} parent=11 // pred_check
        %p346 = pneg %p113
      $region18: #{humus_net_forward.4} parent=11 // pred_check_branch
        %348 = sbr.rel (%p346) target = $region20
      $region19: #{humus_net_forward.4} parent=11 // pred_region
        _
      $region20: #{humus_net_forward.4} parent=11 // pred_fallthru
        _
      // Predicated region
      $region21: #{humus_net_forward.4} parent=11 // pred_check
        %p349 = pneg %p134
      $region22: #{humus_net_forward.4} parent=11 // pred_check_branch
        %351 = sbr.rel (%p349) target = $region24
      $region23: #{humus_net_forward.4} parent=11 // pred_region
        _
      $region24: #{humus_net_forward.4} parent=11 // pred_fallthru
        _
      // Predicated region
      $region25: #{humus_net_forward.4} parent=11 // pred_check
        %p352 = pneg %p155
      $region26: #{humus_net_forward.4} parent=11 // pred_check_branch
        %354 = sbr.rel (%p352) target = $region28
      $region27: #{humus_net_forward.4} parent=11 // pred_region
        _
      $region28: #{humus_net_forward.4} parent=11 // pred_fallthru
        _
      // Predicated region
      $region29: #{humus_net_forward.4} parent=11 // pred_check
        %p355 = pneg %p176
      $region30: #{humus_net_forward.4} parent=11 // pred_check_branch
        %357 = sbr.rel (%p355) target = $region32
      $region31: #{humus_net_forward.4} parent=11 // pred_region
        _
      $region32: #{humus_net_forward.4} parent=11 // pred_fallthru
        _
      // Predicated region
      $region33: #{humus_net_forward.4} parent=11 // pred_check
        %p358 = pneg %p197
      $region34: #{humus_net_forward.4} parent=11 // pred_check_branch
        %360 = sbr.rel (%p358) target = $region36
      $region35: #{humus_net_forward.4} parent=11 // pred_region
        _
      $region36: #{humus_net_forward.4} parent=11 // pred_fallthru
        _
      // Predicated region
      $region37: #{humus_net_forward.4} parent=11 // pred_check
        %p361 = pneg %p218
      $region38: #{humus_net_forward.4} parent=11 // pred_check_branch
        %363 = sbr.rel (%p361) target = $region40
      $region39: #{humus_net_forward.4} parent=11 // pred_region
        _
      $region40: #{humus_net_forward.4} parent=11 // pred_fallthru
        _
      // Predicated region
      $region41: #{humus_net_forward.4} parent=11 // pred_check
        %p364 = pneg %p239
      $region42: #{humus_net_forward.4} parent=11 // pred_check_branch
        %366 = sbr.rel (%p364) target = $region44
      $region43: #{humus_net_forward.4} parent=11 // pred_region
        _
      $region44: #{humus_net_forward.4} parent=11 // pred_fallthru
        _
      // Predicated region
      $region45: #{humus_net_forward.4} parent=11 // pred_check
        %p367 = pneg %p260
      $region46: #{humus_net_forward.4} parent=11 // pred_check_branch
        %369 = sbr.rel (%p367) target = $region48
      $region47: #{humus_net_forward.4} parent=11 // pred_region
        _
      $region48: #{humus_net_forward.4} parent=11 // pred_fallthru
        _
      // Predicated region
      $region49: #{humus_net_forward.4} parent=11 // pred_check
        %p370 = pneg %p281
      $region50: #{humus_net_forward.4} parent=11 // pred_check_branch
        %372 = sbr.rel (%p370) target = $region52
      $region51: #{humus_net_forward.4} parent=11 // pred_region
        _
      $region52: #{humus_net_forward.4} parent=11 // pred_fallthru
        _
      // Predicated region
      $region53: #{humus_net_forward.4} parent=11 // pred_check
        %p373 = pneg %p302
      $region54: #{humus_net_forward.4} parent=11 // pred_check_branch
        %375 = sbr.rel (%p373) target = $region56
      $region55: #{humus_net_forward.4} parent=11 // pred_region
        _
      $region56: #{humus_net_forward.4} parent=11 // pred_fallthru
        _
    $region12: #{humus_net_forward.4} parent=5 // pred_fallthru
      _
    %p376 = scmp.lt.s32.totalorder %s19, 2
    // Predicated region
    $region57: #{humus_net_forward.4} parent=5 // pred_check
      %p377 = pneg %p376
    $region58: #{humus_net_forward.4} parent=5 // pred_check_branch
      %379 = sbr.rel (%p377) target = $region60
    $region59: #{humus_net_forward.4} parent=5 // pred_region
      // Predicated region
      $region61: #{humus_net_forward.4} parent=59 // pred_check
        %p380 = pneg %p39
      $region62: #{humus_net_forward.4} parent=59 // pred_check_branch
        %382 = sbr.rel (%p380) target = $region64
      $region63: #{humus_net_forward.4} parent=59 // pred_region
        %p383 = scmp.lt.s32.totalorder %s19, 1
        %s384 = scalar_select %p383, %s19, 1
        %s385 = smul.addr %s384, 2
        %s386 = smul.addr %s385, 8
        %s387 = scalar_lea.vmem %s0, %s386
      $region64: #{humus_net_forward.4} parent=59 // pred_fallthru
        _
      // Predicated region
      $region65: #{humus_net_forward.4} parent=59 // pred_check
        %p388 = pneg %p65
      $region66: #{humus_net_forward.4} parent=59 // pred_check_branch
        %390 = sbr.rel (%p388) target = $region68
      $region67: #{humus_net_forward.4} parent=59 // pred_region
        %p391 = scmp.lt.s32.totalorder %s19, 1
        %s392 = scalar_select %p391, %s19, 1
        %s393 = smul.addr %s392, 2
        %s394 = smul.addr %s393, 2
        %s395 = scalar_lea.vmem %s1, %s394
      $region68: #{humus_net_forward.4} parent=59 // pred_fallthru
        _
    $region60: #{humus_net_forward.4} parent=5 // pred_fallthru
      _
    %p396 = scmp.le.s32.totalorder 1, %s19
    %p397 = scmp.lt.s32.totalorder %s19, 3
    %p398 = pnand %p396, %p397
    %p399 = pneg %p398
    // Predicated region
    $region69: #{humus_net_forward.4} parent=5 // pred_check
      _
    $region70: #{humus_net_forward.4} parent=5 // pred_check_branch
      %401 = sbr.rel (%p398) target = $region72
    $region71: #{humus_net_forward.4} parent=5 // pred_region
      %s402 = ssub.s32 %s19, 1
      %p403 = scmp.lt.s32.totalorder %s24, 1
      %s404 = scalar_select %p403, %s24, 1
      %s405 = smul.addr %s404, 2
      %s406 = smul.addr %s405, 8
      %s407 = scalar_lea.vmem %s0, %s406
      %p408 = pneg %p45
      %p409 = pneg %p42
      %p410 = scmp.lt.s32.totalorder %s24, 1
      %s411 = scalar_select %p410, %s24, 1
      %s412 = smul.addr %s411, 2
      %s413 = smul.addr %s412, 2
      %s414 = scalar_lea.vmem %s1, %s413
      %p415 = pneg %p71
      %p416 = pneg %p68
      %p417 = pneg %p92
      %p418 = pneg %p89
      %p419 = pneg %p113
      %p420 = pneg %p110
      %p421 = pneg %p134
      %p422 = pneg %p131
      %p423 = pneg %p155
      %p424 = pneg %p152
      %p425 = pneg %p176
      %p426 = pneg %p173
      %p427 = pneg %p197
      %p428 = pneg %p194
      %p429 = pneg %p218
      %p430 = pneg %p215
      %p431 = pneg %p239
      %p432 = pneg %p236
      %p433 = pneg %p260
      %p434 = pneg %p257
      %p435 = pneg %p281
      %p436 = pneg %p278
      %p437 = pneg %p302
      %p438 = pneg %p299
      %p439 = pneg %p328
      %p440 = pneg %p325
      %p441 = scmp.lt.s32.totalorder %s24, 1
      %s442 = scalar_select %p441, %s24, 1
      %s443 = smul.addr %s442, 2
      %s444 = smul.addr %s443, 2
      %s445 = scalar_lea.vmem %s13, %s444
      %p446 = scmp.lt.s32.totalorder %s24, 1
      %s447 = scalar_select %p446, %s24, 1
      %s448 = smul.addr %s447, 2
      %s449 = smul.addr %s448, 8
      %s450 = scalar_lea.vmem %s0, %s449
      %p451 = scmp.lt.s32.totalorder %s24, 1
      %s452 = scalar_select %p451, %s24, 1
      %s453 = smul.addr %s452, 2
      %s454 = smul.addr %s453, 2
      %s455 = scalar_lea.vmem %s1, %s454
      %p456 = scmp.lt.s32.totalorder %s24, 1
      %s457 = scalar_select %p456, %s24, 1
      %s458 = smul.addr %s457, 2
      %s459 = smul.addr %s458, 2
      %s460 = scalar_lea.vmem %s13, %s459
      %v461 = vld [vmem:[%s450] sm:$0xff]
      %v462 = vld [vmem:[%s450 + $0x8] sm:$0xff]
      %v463 = vld [vmem:[%s2] sm:$0xff]
      %v464 = vld [vmem:[%s2 + $0x8] sm:$0xff]
      %v465 = vld [vmem:[%s2 + $0x10] sm:$0xff]
      %v466 = vld [vmem:[%s2 + $0x18] sm:$0xff]
      %v467 = vld [vmem:[%s2 + $0x20] sm:$0xff]
      %v468 = vld [vmem:[%s2 + $0x28] sm:$0xff]
      %v469 = vld [vmem:[%s2 + $0x30] sm:$0xff]
      %v470 = vld [vmem:[%s2 + $0x38] sm:$0xff]
      %v471 = vld [vmem:[%s2 + $0x40] sm:$0xff]
      %v472 = vld [vmem:[%s2 + $0x48] sm:$0xff]
      %v473 = vld [vmem:[%s2 + $0x50] sm:$0xff]
      %v474 = vld [vmem:[%s2 + $0x58] sm:$0xff]
      %v475 = vld [vmem:[%s2 + $0x60] sm:$0xff]
      %v476 = vld [vmem:[%s2 + $0x68] sm:$0xff]
      %v477 = vld [vmem:[%s2 + $0x70] sm:$0xff]
      %v478 = vld [vmem:[%s2 + $0x78] sm:$0xff]
      %v479 = vld [vmem:[%s2 + $0x80] sm:$0xff]
      %v480 = vld [vmem:[%s2 + $0x88] sm:$0xff]
      %v481 = vld [vmem:[%s2 + $0x90] sm:$0xff]
      %v482 = vld [vmem:[%s2 + $0x98] sm:$0xff]
      %v483 = vld [vmem:[%s2 + $0xa0] sm:$0xff]
      %v484 = vld [vmem:[%s2 + $0xa8] sm:$0xff]
      %v485 = vld [vmem:[%s2 + $0xb0] sm:$0xff]
      %v486 = vld [vmem:[%s2 + $0xb8] sm:$0xff]
      %v487 = vld [vmem:[%s2 + $0xc0] sm:$0x3]
      %v488 = vld [vmem:[%s2 + $0xc8] sm:$0x3]
      %v489 = vld [vmem:[%s2 + $0xd0] sm:$0x3]
      %v490 = vld [vmem:[%s3] sm:$0x7]
      %v492 = vlaneseq
      %v493 = vshrl.u32 %v492, 7
      %v494 = vsub.s32 0, %v493
      %v495 = vrot.slane %v490, %v494
      %v496 = vlaneseq
      %v497 = vshrl.u32 %v496, 7
      %v498 = vsub.s32 1, %v497
      %v499 = vrot.slane %v490, %v498
      %v500 = vlaneseq
      %v501 = vshrl.u32 %v500, 7
      %v502 = vsub.s32 2, %v501
      %v503 = vrot.slane %v490, %v502
      %vm507 = vcmask 539648
      %v509 = vsel %vm507, %v461, 0
      %v512 = vsel %vm507, %v462, 0
      %vm514 = vcmask 1041408
      %v516 = vsel %vm514, %v487, 0
      %v519 = vsel %vm514, %v488, 0
      %v522 = vsel %vm514, %v489, 0
      %524 = vmatprep.subr.mxu0 %v464
      %525 = vmatpush1.msra.mxu0 %v463
      %526 = vmatprep.subr.mxu0 %v467
      %527 = vmatpush1.msra.mxu0 %v466
      %528 = vmatprep.subr.mxu0 %v470
      %529 = vmatpush1.msra.mxu0 %v469
      %530 = vmatprep.subr.mxu0 %v473
      %531 = vmatpush1.msra.mxu0 %v472
      %532 = vmatprep.subr.mxu0 %v476
      %533 = vmatpush1.msra.mxu0 %v475
      %534 = vmatprep.subr.mxu0 %v479
      %535 = vmatpush1.msra.mxu0 %v478
      %536 = vmatprep.subr.mxu0 %v482
      %537 = vmatpush1.msra.mxu0 %v481
      %538 = vmatprep.subr.mxu0 %v485
      %539 = vmatpush1.msra.mxu0 %v484
      %540 = vmatprep.subr.mxu0 %v519
      %541 = vmatpush1.msra.mxu0 %v516
      %542 = vmatprep.subr.mxu0 0.0
      %543 = vmatpush1.msra.mxu0 0.0
      %544 = vmatprep.subr.mxu0 0.0
      %545 = vmatpush1.msra.mxu0 0.0
      %546 = vmatprep.subr.mxu0 0.0
      %547 = vmatpush1.msra.mxu0 0.0
      %548 = vmatprep.subr.mxu0 0.0
      %549 = vmatpush1.msra.mxu0 0.0
      %550 = vmatprep.subr.mxu0 0.0
      %551 = vmatpush1.msra.mxu0 0.0
      %552 = vmatprep.subr.mxu0 0.0
      %553 = vmatpush1.msra.mxu0 0.0
      %554 = vmatprep.subr.mxu0 0.0
      %555 = vmatpush1.msra.mxu0 0.0
      %556 = vmatprep.subr.mxu0 0.0
      %557 = vmatpush1.msra.mxu0 0.0
      %558 = vmatprep.subr.mxu0 0.0
      %559 = vmatpush1.msra.mxu0 0.0
      %560 = vmatprep.subr.mxu0 0.0
      %561 = vmatpush1.msra.mxu0 0.0
      %562 = vmatprep.subr.mxu0 0.0
      %563 = vmatpush1.msra.mxu0 0.0
      %564 = vmatprep.subr.mxu0 0.0
      %565 = vmatpush1.msra.mxu0 0.0
      %566 = vmatprep.subr.mxu0 0.0
      %567 = vmatpush1.msra.mxu0 0.0
      %568 = vmatprep.subr.mxu0 0.0
      %569 = vmatpush1.msra.mxu0 0.0
      %570 = vmatprep.subr.mxu0 0.0
      %571 = vmatpush1.msra.mxu0 0.0
      %572 = vmatprep.subr.mxu0 0.0
      %573 = vmatpush1.msra.mxu0 0.0
      %574 = vmatprep.subr.mxu0 0.0
      %575 = vmatpush1.msra.mxu0 0.0
      %576 = vmatprep.subr.mxu0 0.0
      %577 = vmatpush1.msra.mxu0 0.0
      %578 = vmatprep.subr.mxu0 0.0
      %579 = vmatpush1.msra.mxu0 0.0
      %580 = vmatprep.subr.mxu0 0.0
      %581 = vmatpush1.msra.mxu0 0.0
      %582 = vmatprep.subr.mxu0 0.0
      %583 = vmatpush1.msra.mxu0 0.0
      %584 = vmatprep.subr.mxu0 0.0
      %585 = vmatpush1.msra.mxu0 0.0
      %586 = vmatprep.subr.mxu0 0.0
      %587 = vmatpush1.msra.mxu0 0.0
      %588 = vmatprep.mubr.f32.mxu0 0.0
      %589 = vmatmul.mubr.f32.gmra.mrb[0].mxu0 %v509
      %v590 = vpop.f32.mrb[0].mxu0
      %v591 = vadd.f32 %v495, %v590
      %v592 = vpop.f32.mrb[0].mxu0
      %v593 = vadd.f32 %v499, %v592
      %594 = vmatprep.mubr.f32.mxu0 0.0
      %595 = vmatmul.mubr.f32.gmra.mrb[0].mxu0 %v512
      %v596 = vpop.f32.mrb[0].mxu0
      %v597 = vadd.f32 %v495, %v596
      %v598 = vpop.f32.mrb[0].mxu0
      %v599 = vadd.f32 %v499, %v598
      %600 = vdwg.mxu0
      %601 = vmatprep.subr.mxu0 0.0
      %602 = vmatpush1.msra.mxu0 %v465
      %603 = vmatprep.subr.mxu0 0.0
      %604 = vmatpush1.msra.mxu0 %v468
      %605 = vmatprep.subr.mxu0 0.0
      %606 = vmatpush1.msra.mxu0 %v471
      %607 = vmatprep.subr.mxu0 0.0
      %608 = vmatpush1.msra.mxu0 %v474
      %609 = vmatprep.subr.mxu0 0.0
      %610 = vmatpush1.msra.mxu0 %v477
      %611 = vmatprep.subr.mxu0 0.0
      %612 = vmatpush1.msra.mxu0 %v480
      %613 = vmatprep.subr.mxu0 0.0
      %614 = vmatpush1.msra.mxu0 %v483
      %615 = vmatprep.subr.mxu0 0.0
      %616 = vmatpush1.msra.mxu0 %v486
      %617 = vmatprep.subr.mxu0 0.0
      %618 = vmatpush1.msra.mxu0 %v522
      %619 = vmatprep.subr.mxu0 0.0
      %620 = vmatpush1.msra.mxu0 0.0
      %621 = vmatprep.subr.mxu0 0.0
      %622 = vmatpush1.msra.mxu0 0.0
      %623 = vmatprep.subr.mxu0 0.0
      %624 = vmatpush1.msra.mxu0 0.0
      %625 = vmatprep.subr.mxu0 0.0
      %626 = vmatpush1.msra.mxu0 0.0
      %627 = vmatprep.subr.mxu0 0.0
      %628 = vmatpush1.msra.mxu0 0.0
      %629 = vmatprep.subr.mxu0 0.0
      %630 = vmatpush1.msra.mxu0 0.0
      %631 = vmatprep.subr.mxu0 0.0
      %632 = vmatpush1.msra.mxu0 0.0
      %633 = vmatprep.subr.mxu0 0.0
      %634 = vmatpush1.msra.mxu0 0.0
      %635 = vmatprep.subr.mxu0 0.0
      %636 = vmatpush1.msra.mxu0 0.0
      %637 = vmatprep.subr.mxu0 0.0
      %638 = vmatpush1.msra.mxu0 0.0
      %639 = vmatprep.subr.mxu0 0.0
      %640 = vmatpush1.msra.mxu0 0.0
      %641 = vmatprep.subr.mxu0 0.0
      %642 = vmatpush1.msra.mxu0 0.0
      %643 = vmatprep.subr.mxu0 0.0
      %644 = vmatpush1.msra.mxu0 0.0
      %645 = vmatprep.subr.mxu0 0.0
      %646 = vmatpush1.msra.mxu0 0.0
      %647 = vmatprep.subr.mxu0 0.0
      %648 = vmatpush1.msra.mxu0 0.0
      %649 = vmatprep.subr.mxu0 0.0
      %650 = vmatpush1.msra.mxu0 0.0
      %651 = vmatprep.subr.mxu0 0.0
      %652 = vmatpush1.msra.mxu0 0.0
      %653 = vmatprep.subr.mxu0 0.0
      %654 = vmatpush1.msra.mxu0 0.0
      %655 = vmatprep.subr.mxu0 0.0
      %656 = vmatpush1.msra.mxu0 0.0
      %657 = vmatprep.subr.mxu0 0.0
      %658 = vmatpush1.msra.mxu0 0.0
      %659 = vmatprep.subr.mxu0 0.0
      %660 = vmatpush1.msra.mxu0 0.0
      %661 = vmatprep.subr.mxu0 0.0
      %662 = vmatpush1.msra.mxu0 0.0
      %663 = vmatprep.subr.mxu0 0.0
      %664 = vmatpush1.msra.mxu0 0.0
      %665 = vmatprep.mubr.f32.mxu0 0.0
      %666 = vmatmul.mubr.f32.gmra.mrb[0].mxu0 %v509
      %v667 = vpop.f32.mrb[0].mxu0
      %v668 = vadd.f32 %v503, %v667
      %v669 = vpop.f32.mrb[0].mxu0
      %670 = vmatprep.mubr.f32.mxu0 0.0
      %671 = vmatmul.mubr.f32.gmra.mrb[0].mxu0 %v512
      %v672 = vpop.f32.mrb[0].mxu0
      %v673 = vadd.f32 %v503, %v672
      %v674 = vpop.f32.mrb[0].mxu0
      %675 = vdwg.mxu0
      %v676 = vxor.u32 %v591, 2147483648
      %v677 = vxor.u32 %v593, 2147483648
      %v678 = vxor.u32 %v668, 2147483648
      %v679 = vxor.u32 %v597, 2147483648
      %v680 = vxor.u32 %v599, 2147483648
      %v681 = vxor.u32 %v673, 2147483648
      %v682 = vmul.f32 %v676, 1.442695
      %v683 = vpow.pop %v682
      %v684 = vmul.f32 %v677, 1.442695
      %v685 = vpow.pop %v684
      %v686 = vmul.f32 %v678, 1.442695
      %v687 = vpow.pop %v686
      %v688 = vmul.f32 %v679, 1.442695
      %v689 = vpow.pop %v688
      %v690 = vmul.f32 %v680, 1.442695
      %v691 = vpow.pop %v690
      %v692 = vmul.f32 %v681, 1.442695
      %v693 = vpow.pop %v692
      %v694 = vadd.f32 %v683, 1.0
      %v695 = vadd.f32 %v685, 1.0
      %v696 = vadd.f32 %v687, 1.0
      %v697 = vadd.f32 %v689, 1.0
      %v698 = vadd.f32 %v691, 1.0
      %v699 = vadd.f32 %v693, 1.0
      %v700 = vrcp.pop %v694
      %v701 = vmul.f32 1.0, %v700
      %v702 = vrcp.pop %v695
      %v703 = vmul.f32 1.0, %v702
      %v704 = vrcp.pop %v696
      %v705 = vmul.f32 1.0, %v704
      %v706 = vrcp.pop %v697
      %v707 = vmul.f32 1.0, %v706
      %v708 = vrcp.pop %v698
      %v709 = vmul.f32 1.0, %v708
      %v710 = vrcp.pop %v699
      %v711 = vmul.f32 1.0, %v710
      %v712 = vmul.f32 %v591, %v701
      %v713 = vmul.f32 %v593, %v703
      %v714 = vmul.f32 %v668, %v705
      %v715 = vmul.f32 %v597, %v707
      %v716 = vmul.f32 %v599, %v709
      %v717 = vmul.f32 %v673, %v711
      %v718 = vld [vmem:[%s4] sm:$0xff]
      %v719 = vld [vmem:[%s4 + $0x8] sm:$0xff]
      %v720 = vld [vmem:[%s4 + $0x10] sm:$0xff]
      %v721 = vld [vmem:[%s4 + $0x18] sm:$0xff]
      %v722 = vld [vmem:[%s4 + $0x20] sm:$0xff]
      %v723 = vld [vmem:[%s4 + $0x28] sm:$0xff]
      %v724 = vld [vmem:[%s4 + $0x30] sm:$0xff]
      %v725 = vld [vmem:[%s4 + $0x38] sm:$0xff]
      %v726 = vld [vmem:[%s4 + $0x40] sm:$0xff]
      %v727 = vld [vmem:[%s4 + $0x48] sm:$0xff]
      %v728 = vld [vmem:[%s4 + $0x50] sm:$0xff]
      %v729 = vld [vmem:[%s4 + $0x58] sm:$0xff]
      %v730 = vld [vmem:[%s4 + $0x60] sm:$0xff]
      %v731 = vld [vmem:[%s4 + $0x68] sm:$0xff]
      %v732 = vld [vmem:[%s4 + $0x70] sm:$0xff]
      %v733 = vld [vmem:[%s4 + $0x78] sm:$0xff]
      %v734 = vld [vmem:[%s4 + $0x80] sm:$0xff]
      %v735 = vld [vmem:[%s4 + $0x88] sm:$0xff]
      %v736 = vld [vmem:[%s4 + $0x90] sm:$0xff]
      %v737 = vld [vmem:[%s4 + $0x98] sm:$0xff]
      %v738 = vld [vmem:[%s4 + $0xa0] sm:$0xff]
      %v739 = vld [vmem:[%s4 + $0xa8] sm:$0xff]
      %v740 = vld [vmem:[%s4 + $0xb0] sm:$0xff]
      %v741 = vld [vmem:[%s4 + $0xb8] sm:$0xff]
      %v742 = vld [vmem:[%s4 + $0xc0] sm:$0xff]
      %v743 = vld [vmem:[%s4 + $0xc8] sm:$0xff]
      %v744 = vld [vmem:[%s4 + $0xd0] sm:$0xff]
      %v745 = vld [vmem:[%s4 + $0xd8] sm:$0xff]
      %v746 = vld [vmem:[%s4 + $0xe0] sm:$0xff]
      %v747 = vld [vmem:[%s4 + $0xe8] sm:$0xff]
      %v748 = vld [vmem:[%s4 + $0xf0] sm:$0xff]
      %v749 = vld [vmem:[%s4 + $0xf8] sm:$0xff]
      %v750 = vld [vmem:[%s4 + $0x100] sm:$0xff]
      %v751 = vld [vmem:[%s5] sm:$0x1]
      %v753 = vlaneseq
      %v754 = vshrl.u32 %v753, 7
      %v755 = vsub.s32 0, %v754
      %v756 = vrot.slane %v751, %v755
      %vm758 = vcmask 64512
      %v760 = vsel %vm758, %v714, 0
      %v763 = vsel %vm758, %v717, 0
      %765 = vmatprep.subr.mxu0 0.0
      %766 = vmatpush1.msra.mxu0 %v718
      %767 = vmatprep.subr.mxu0 0.0
      %768 = vmatpush1.msra.mxu0 %v719
      %769 = vmatprep.subr.mxu0 0.0
      %770 = vmatpush1.msra.mxu0 %v720
      %771 = vmatprep.subr.mxu0 0.0
      %772 = vmatpush1.msra.mxu0 %v721
      %773 = vmatprep.subr.mxu0 0.0
      %774 = vmatpush1.msra.mxu0 %v722
      %775 = vmatprep.subr.mxu0 0.0
      %776 = vmatpush1.msra.mxu0 %v723
      %777 = vmatprep.subr.mxu0 0.0
      %778 = vmatpush1.msra.mxu0 %v724
      %779 = vmatprep.subr.mxu0 0.0
      %780 = vmatpush1.msra.mxu0 %v725
      %781 = vmatprep.subr.mxu0 0.0
      %782 = vmatpush1.msra.mxu0 %v726
      %783 = vmatprep.subr.mxu0 0.0
      %784 = vmatpush1.msra.mxu0 %v727
      %785 = vmatprep.subr.mxu0 0.0
      %786 = vmatpush1.msra.mxu0 %v728
      %787 = vmatprep.subr.mxu0 0.0
      %788 = vmatpush1.msra.mxu0 %v729
      %789 = vmatprep.subr.mxu0 0.0
      %790 = vmatpush1.msra.mxu0 %v730
      %791 = vmatprep.subr.mxu0 0.0
      %792 = vmatpush1.msra.mxu0 %v731
      %793 = vmatprep.subr.mxu0 0.0
      %794 = vmatpush1.msra.mxu0 %v732
      %795 = vmatprep.subr.mxu0 0.0
      %796 = vmatpush1.msra.mxu0 %v733
      %797 = vmatprep.subr.mxu0 0.0
      %798 = vmatpush1.msra.mxu0 %v734
      %799 = vmatprep.subr.mxu0 0.0
      %800 = vmatpush1.msra.mxu0 %v735
      %801 = vmatprep.subr.mxu0 0.0
      %802 = vmatpush1.msra.mxu0 %v736
      %803 = vmatprep.subr.mxu0 0.0
      %804 = vmatpush1.msra.mxu0 %v737
      %805 = vmatprep.subr.mxu0 0.0
      %806 = vmatpush1.msra.mxu0 %v738
      %807 = vmatprep.subr.mxu0 0.0
      %808 = vmatpush1.msra.mxu0 %v739
      %809 = vmatprep.subr.mxu0 0.0
      %810 = vmatpush1.msra.mxu0 %v740
      %811 = vmatprep.subr.mxu0 0.0
      %812 = vmatpush1.msra.mxu0 %v741
      %813 = vmatprep.subr.mxu0 0.0
      %814 = vmatpush1.msra.mxu0 %v742
      %815 = vmatprep.subr.mxu0 0.0
      %816 = vmatpush1.msra.mxu0 %v743
      %817 = vmatprep.subr.mxu0 0.0
      %818 = vmatpush1.msra.mxu0 %v744
      %819 = vmatprep.subr.mxu0 0.0
      %820 = vmatpush1.msra.mxu0 %v745
      %821 = vmatprep.subr.mxu0 0.0
      %822 = vmatpush1.msra.mxu0 %v746
      %823 = vmatprep.subr.mxu0 0.0
      %824 = vmatpush1.msra.mxu0 %v747
      %825 = vmatprep.subr.mxu0 0.0
      %826 = vmatpush1.msra.mxu0 %v748
      %827 = vmatprep.subr.mxu0 0.0
      %828 = vmatpush1.msra.mxu0 %v749
      %829 = vmatprep.mubr.f32.mxu0 %v713
      %830 = vmatmul.mubr.f32.gmra.mrb[0].mxu0 %v712
      %v831 = vpop.f32.mrb[0].mxu0
      %v832 = vadd.f32 %v756, %v831
      %v833 = vpop.f32.mrb[0].mxu0
      %834 = vmatprep.mubr.f32.mxu0 %v716
      %835 = vmatmul.mubr.f32.gmra.mrb[0].mxu0 %v715
      %v836 = vpop.f32.mrb[0].mxu0
      %v837 = vadd.f32 %v756, %v836
      %v838 = vpop.f32.mrb[0].mxu0
      %839 = vdwg.mxu0
      %840 = vmatprep.subr.mxu0 0.0
      %841 = vmatpush1.msra.mxu0 %v750
      %842 = vmatprep.subr.mxu0 0.0
      %843 = vmatpush1.msra.mxu0 0.0
      %844 = vmatprep.subr.mxu0 0.0
      %845 = vmatpush1.msra.mxu0 0.0
      %846 = vmatprep.subr.mxu0 0.0
      %847 = vmatpush1.msra.mxu0 0.0
      %848 = vmatprep.subr.mxu0 0.0
      %849 = vmatpush1.msra.mxu0 0.0
      %850 = vmatprep.subr.mxu0 0.0
      %851 = vmatpush1.msra.mxu0 0.0
      %852 = vmatprep.subr.mxu0 0.0
      %853 = vmatpush1.msra.mxu0 0.0
      %854 = vmatprep.subr.mxu0 0.0
      %855 = vmatpush1.msra.mxu0 0.0
      %856 = vmatprep.subr.mxu0 0.0
      %857 = vmatpush1.msra.mxu0 0.0
      %858 = vmatprep.subr.mxu0 0.0
      %859 = vmatpush1.msra.mxu0 0.0
      %860 = vmatprep.subr.mxu0 0.0
      %861 = vmatpush1.msra.mxu0 0.0
      %862 = vmatprep.subr.mxu0 0.0
      %863 = vmatpush1.msra.mxu0 0.0
      %864 = vmatprep.subr.mxu0 0.0
      %865 = vmatpush1.msra.mxu0 0.0
      %866 = vmatprep.subr.mxu0 0.0
      %867 = vmatpush1.msra.mxu0 0.0
      %868 = vmatprep.subr.mxu0 0.0
      %869 = vmatpush1.msra.mxu0 0.0
      %870 = vmatprep.subr.mxu0 0.0
      %871 = vmatpush1.msra.mxu0 0.0
      %872 = vmatprep.subr.mxu0 0.0
      %873 = vmatpush1.msra.mxu0 0.0
      %874 = vmatprep.subr.mxu0 0.0
      %875 = vmatpush1.msra.mxu0 0.0
      %876 = vmatprep.subr.mxu0 0.0
      %877 = vmatpush1.msra.mxu0 0.0
      %878 = vmatprep.subr.mxu0 0.0
      %879 = vmatpush1.msra.mxu0 0.0
      %880 = vmatprep.subr.mxu0 0.0
      %881 = vmatpush1.msra.mxu0 0.0
      %882 = vmatprep.subr.mxu0 0.0
      %883 = vmatpush1.msra.mxu0 0.0
      %884 = vmatprep.subr.mxu0 0.0
      %885 = vmatpush1.msra.mxu0 0.0
      %886 = vmatprep.subr.mxu0 0.0
      %887 = vmatpush1.msra.mxu0 0.0
      %888 = vmatprep.subr.mxu0 0.0
      %889 = vmatpush1.msra.mxu0 0.0
      %890 = vmatprep.subr.mxu0 0.0
      %891 = vmatpush1.msra.mxu0 0.0
      %892 = vmatprep.subr.mxu0 0.0
      %893 = vmatpush1.msra.mxu0 0.0
      %894 = vmatprep.subr.mxu0 0.0
      %895 = vmatpush1.msra.mxu0 0.0
      %896 = vmatprep.subr.mxu0 0.0
      %897 = vmatpush1.msra.mxu0 0.0
      %898 = vmatprep.subr.mxu0 0.0
      %899 = vmatpush1.msra.mxu0 0.0
      %900 = vmatprep.subr.mxu0 0.0
      %901 = vmatpush1.msra.mxu0 0.0
      %902 = vmatprep.subr.mxu0 0.0
      %903 = vmatpush1.msra.mxu0 0.0
      %904 = vmatprep.mubr.f32.mxu0 0.0
      %905 = vmatmul.mubr.f32.gmra.mrb[0].mxu0 %v760
      %v906 = vpop.f32.mrb[0].mxu0
      %v907 = vadd.f32 %v832, %v906
      %v908 = vpop.f32.mrb[0].mxu0
      %909 = vmatprep.mubr.f32.mxu0 0.0
      %910 = vmatmul.mubr.f32.gmra.mrb[0].mxu0 %v763
      %v911 = vpop.f32.mrb[0].mxu0
      %v912 = vadd.f32 %v837, %v911
      %v913 = vpop.f32.mrb[0].mxu0
      %914 = vdwg.mxu0
      %v915 = vsel %vm507, %v907, 0.0
      %916 = vadd.xlane.f32.xlu0 %v915
      %v917 = vpop.xlane.xlu0 %916
      %v918 = vsel %vm507, %v912, 0.0
      %919 = vadd.xlane.f32.xlu0 %v918
      %v920 = vpop.xlane.xlu0 %919
      %v921 = vrcp.pop 66.0
      %v922 = vmul.f32 %v917, %v921
      %v923 = vmul.f32 %v920, %v921
      %v924 = vsub.f32 %v907, %v922
      %v925 = vsub.f32 %v912, %v923
      %v926 = vmul.f32 %v924, %v924
      %v927 = vmul.f32 %v925, %v925
      %v928 = vsel %vm507, %v926, 0.0
      %929 = vadd.xlane.f32.xlu0 %v928
      %v930 = vpop.xlane.xlu0 %929
      %v931 = vsel %vm507, %v927, 0.0
      %932 = vadd.xlane.f32.xlu0 %v931
      %v933 = vpop.xlane.xlu0 %932
      %v934 = vmul.f32 %v930, %v921
      %v935 = vmul.f32 %v933, %v921
      %v936 = vadd.f32 %v934, 1e-05
      %v937 = vadd.f32 %v935, 1e-05
      %v938 = vrsqrt.pop %v936
      %v939 = vrsqrt.pop %v937
      %v940 = vmul.f32 %v924, %v938
      %v941 = vmul.f32 %v925, %v939
      %v942 = vld [vmem:[%s6] sm:$0x1]
      %v944 = vlaneseq
      %v945 = vshrl.u32 %v944, 7
      %v946 = vsub.s32 0, %v945
      %v947 = vrot.slane %v942, %v946
      %v949 = vmul.f32 %v940, %v947
      %v950 = vmul.f32 %v941, %v947
      %v951 = vld [vmem:[%s7] sm:$0x1]
      %v953 = vlaneseq
      %v954 = vshrl.u32 %v953, 7
      %v955 = vsub.s32 0, %v954
      %v956 = vrot.slane %v951, %v955
      %v958 = vadd.f32 %v949, %v956
      %v959 = vadd.f32 %v950, %v956
      %v960 = vsel %vm507, %v958, 0.0
      %v961 = vsel %vm507, %v959, 0.0
      %v962 = vadd.f32 %v960, %v961
      %v963 = vrot.slane %v962, 4
      %v964 = vadd.f32 %v962, %v963
      %v965 = vrot.slane %v964, 2
      %v966 = vadd.f32 %v964, %v965
      %v967 = vrot.slane %v966, 1
      %v968 = vadd.f32 %v966, %v967
      %v969 = vrcp.pop 16.0
      %v970 = vmul.f32 %v968, %v969
      %v971 = vld [vmem:[%s8] sm:$0xff]
      %v972 = vld [vmem:[%s8 + $0x8] sm:$0xff]
      %v973 = vld [vmem:[%s8 + $0x10] sm:$0xff]
      %v974 = vld [vmem:[%s8 + $0x18] sm:$0xff]
      %v975 = vmul.f32 %v971, %v970
      %v976 = vmul.f32 %v972, %v970
      %v977 = vmul.f32 %v973, %v970
      %v978 = vmul.f32 %v974, %v970
      %v979 = vsel %vm507, %v975, 0.0
      %980 = vadd.xlane.f32.xlu0 %v979
      %v981 = vpop.xlane.xlu0 %980
      %v982 = vsel %vm507, %v976, 0.0
      %983 = vadd.xlane.f32.xlu0 %v982
      %v984 = vpop.xlane.xlu0 %983
      %v985 = vsel %vm507, %v977, 0.0
      %986 = vadd.xlane.f32.xlu0 %v985
      %v987 = vpop.xlane.xlu0 %986
      %v988 = vsel %vm507, %v978, 0.0
      %989 = vadd.xlane.f32.xlu0 %v988
      %v990 = vpop.xlane.xlu0 %989
      %v991 = vld [vmem:[%s455] sm:$0xf]
      %v994 = vunpack.c.l.s4 1983009808
      %v995 = vunpack.c.0.s8 %v994
      %v996 = vlaneseq
      %v997 = vshrl.u32 %v996, 7
      %v998 = vsub.s32 %v995, %v997
      %v999 = vrot.slane %v991, %v998
      %v1000 = vcombine.high %v999, %v999
      %v1003 = vsel %vm514, %v999, 0.0
      %v1004 = vsel %vm514, %v1000, 0.0
      %v1005 = vadd.f32 %v1003, %v1004
      %1006 = vadd.xlane.f32.xlu0 %v1005
      %v1007 = vpop.xlane.xlu0 %1006
      %v1008 = vrcp.pop 256.0
      %v1009 = vmul.f32 %v1007, %v1008
      %v1012 = vunpack.c.l.s4 269488144
      %v1013 = vunpack.c.0.s8 %v1012
      %v1014 = vlaneseq
      %v1015 = vshrl.u32 %v1014, 7
      %v1016 = vsub.s32 %v1013, %v1015
      %v1017 = vrot.slane %v1009, %v1016
      %v1019 = vsub.f32 %v991, %v1017
      %v1020 = vmul.f32 %v1019, %v1019
      %v1023 = vunpack.c.l.s4 1983009808
      %v1024 = vunpack.c.0.s8 %v1023
      %v1025 = vlaneseq
      %v1026 = vshrl.u32 %v1025, 7
      %v1027 = vsub.s32 %v1024, %v1026
      %v1028 = vrot.slane %v1020, %v1027
      %v1029 = vcombine.high %v1028, %v1028
      %v1032 = vsel %vm514, %v1028, 0.0
      %v1033 = vsel %vm514, %v1029, 0.0
      %v1034 = vadd.f32 %v1032, %v1033
      %1035 = vadd.xlane.f32.xlu0 %v1034
      %v1036 = vpop.xlane.xlu0 %1035
      %v1037 = vrcp.pop 255.0
      %v1038 = vmul.f32 %v1036, %v1037
      %v1039 = vrsqrt.pop %v1038
      %v1040 = vmul.f32 %v1038, %v1039
      %vm1041 = vcmp.eq.f32.partialorder %v1038, inf
      %v1042 = vsel %vm1041, %v1038, %v1040
      %vm1043 = vcmp.eq.f32.partialorder %v1038, 0.0
      %v1044 = vand.u32 %v1038, 2147483648
      %v1045 = vsel %vm1043, %v1044, %v1042
      %v1046 = vmax.f32 %v1045, 1e-06
      %v1049 = vunpack.c.l.s4 269488144
      %v1050 = vunpack.c.0.s8 %v1049
      %v1051 = vlaneseq
      %v1052 = vshrl.u32 %v1051, 7
      %v1053 = vsub.s32 %v1050, %v1052
      %v1054 = vrot.slane %v1046, %v1053
      %v1056 = vrcp.pop %v1054
      %v1057 = vmul.f32 %v1019, %v1056
      %v1058 = vld [vmem:[%s9] sm:$0xff]
      %v1059 = vld [vmem:[%s9 + $0x8] sm:$0xff]
      %v1060 = vld [vmem:[%s9 + $0x10] sm:$0xff]
      %v1061 = vld [vmem:[%s9 + $0x18] sm:$0xff]
      %v1063 = vlaneseq
      %v1064 = vshrl.u32 %v1063, 7
      %v1065 = vsub.s32 0, %v1064
      %v1066 = vrot.slane %v1057, %v1065
      %v1067 = vlaneseq
      %v1068 = vshrl.u32 %v1067, 7
      %v1069 = vsub.s32 2, %v1068
      %v1070 = vrot.slane %v1057, %v1069
      %v1073 = vlaneseq
      %v1074 = vshrl.u32 %v1073, 7
      %v1075 = vsub.s32 0, %v1074
      %v1076 = vrot.slane %v1066, %v1075
      %v1077 = vlaneseq
      %v1078 = vshrl.u32 %v1077, 7
      %v1079 = vsub.s32 0, %v1078
      %v1080 = vrot.slane %v1070, %v1079
      %1082 = vset.pattern.permute.xlu0 0
      %1083 = vperm.xlu0 %1082, %v1058
      %v1084 = vpop.permute.xlu0 %1083
      %1087 = vset.pattern.permute.xlu0 0
      %1088 = vperm.xlu0 %1087, %v1059
      %v1089 = vpop.permute.xlu0 %1088
      %1092 = vset.pattern.permute.xlu0 0
      %1093 = vperm.xlu0 %1092, %v1060
      %v1094 = vpop.permute.xlu0 %1093
      %1097 = vset.pattern.permute.xlu0 0
      %1098 = vperm.xlu0 %1097, %v1061
      %v1099 = vpop.permute.xlu0 %1098
      %v1101 = vmul.f32 %v1076, %v1084
      %v1102 = vmul.f32 %v1080, %v1084
      %v1103 = vmul.f32 %v1076, %v1089
      %v1104 = vmul.f32 %v1080, %v1089
      %v1105 = vmul.f32 %v1076, %v1094
      %v1106 = vmul.f32 %v1080, %v1094
      %v1107 = vmul.f32 %v1076, %v1099
      %v1108 = vmul.f32 %v1080, %v1099
      %v1109 = vlaneseq
      %v1110 = vshrl.u32 %v1109, 7
      %v1111 = vsub.s32 1, %v1110
      %v1112 = vrot.slane %v1057, %v1111
      %v1113 = vlaneseq
      %v1114 = vshrl.u32 %v1113, 7
      %v1115 = vsub.s32 3, %v1114
      %v1116 = vrot.slane %v1057, %v1115
      %v1119 = vlaneseq
      %v1120 = vshrl.u32 %v1119, 7
      %v1121 = vsub.s32 1, %v1120
      %v1122 = vrot.slane %v1112, %v1121
      %v1123 = vlaneseq
      %v1124 = vshrl.u32 %v1123, 7
      %v1125 = vsub.s32 1, %v1124
      %v1126 = vrot.slane %v1116, %v1125
      %1127 = vset.pattern.permute.xlu0 1
      %1128 = vperm.xlu0 %1127, %v1058
      %v1129 = vpop.permute.xlu0 %1128
      %1131 = vset.pattern.permute.xlu0 1
      %1132 = vperm.xlu0 %1131, %v1059
      %v1133 = vpop.permute.xlu0 %1132
      %1135 = vset.pattern.permute.xlu0 1
      %1136 = vperm.xlu0 %1135, %v1060
      %v1137 = vpop.permute.xlu0 %1136
      %1139 = vset.pattern.permute.xlu0 1
      %1140 = vperm.xlu0 %1139, %v1061
      %v1141 = vpop.permute.xlu0 %1140
      %v1143 = vmul.f32 %v1122, %v1129
      %v1144 = vmul.f32 %v1126, %v1129
      %v1145 = vmul.f32 %v1122, %v1133
      %v1146 = vmul.f32 %v1126, %v1133
      %v1147 = vmul.f32 %v1122, %v1137
      %v1148 = vmul.f32 %v1126, %v1137
      %v1149 = vmul.f32 %v1122, %v1141
      %v1150 = vmul.f32 %v1126, %v1141
      %v1151 = vadd.f32 %v1101, %v1143
      %v1152 = vadd.f32 %v1102, %v1144
      %v1153 = vadd.f32 %v1103, %v1145
      %v1154 = vadd.f32 %v1104, %v1146
      %v1155 = vadd.f32 %v1105, %v1147
      %v1156 = vadd.f32 %v1106, %v1148
      %v1157 = vadd.f32 %v1107, %v1149
      %v1158 = vadd.f32 %v1108, %v1150
      %v1159 = vld [vmem:[%s10] sm:$0xff]
      %v1160 = vld [vmem:[%s10 + $0x8] sm:$0xff]
      %v1161 = vld [vmem:[%s10 + $0x10] sm:$0xff]
      %v1162 = vld [vmem:[%s10 + $0x18] sm:$0xff]
      %1164 = vset.pattern.permute.xlu0 0
      %1165 = vperm.xlu0 %1164, %v1159
      %v1166 = vpop.permute.xlu0 %1165
      %1169 = vset.pattern.permute.xlu0 0
      %1170 = vperm.xlu0 %1169, %v1160
      %v1171 = vpop.permute.xlu0 %1170
      %1174 = vset.pattern.permute.xlu0 0
      %1175 = vperm.xlu0 %1174, %v1161
      %v1176 = vpop.permute.xlu0 %1175
      %1179 = vset.pattern.permute.xlu0 0
      %1180 = vperm.xlu0 %1179, %v1162
      %v1181 = vpop.permute.xlu0 %1180
      %v1183 = vadd.f32 %v1151, %v1166
      %v1184 = vadd.f32 %v1152, %v1166
      %v1185 = vadd.f32 %v1153, %v1171
      %v1186 = vadd.f32 %v1154, %v1171
      %v1187 = vadd.f32 %v1155, %v1176
      %v1188 = vadd.f32 %v1156, %v1176
      %v1189 = vadd.f32 %v1157, %v1181
      %v1190 = vadd.f32 %v1158, %v1181
      %v1191 = vadd.f32 %v1183, %v981
      %v1192 = vadd.f32 %v1184, %v981
      %v1193 = vadd.f32 %v1185, %v984
      %v1194 = vadd.f32 %v1186, %v984
      %v1195 = vadd.f32 %v1187, %v987
      %v1196 = vadd.f32 %v1188, %v987
      %v1197 = vadd.f32 %v1189, %v990
      %v1198 = vadd.f32 %v1190, %v990
      %v1199 = vmul.f32 %v1191, %v1191
      %v1200 = vmul.f32 %v1192, %v1192
      %v1201 = vmul.f32 %v1193, %v1193
      %v1202 = vmul.f32 %v1194, %v1194
      %v1203 = vmul.f32 %v1195, %v1195
      %v1204 = vmul.f32 %v1196, %v1196
      %v1205 = vmul.f32 %v1197, %v1197
      %v1206 = vmul.f32 %v1198, %v1198
      %v1207 = vmul.f32 %v1191, %v1199
      %v1208 = vmul.f32 %v1192, %v1200
      %v1209 = vmul.f32 %v1193, %v1201
      %v1210 = vmul.f32 %v1194, %v1202
      %v1211 = vmul.f32 %v1195, %v1203
      %v1212 = vmul.f32 %v1196, %v1204
      %v1213 = vmul.f32 %v1197, %v1205
      %v1214 = vmul.f32 %v1198, %v1206
      %v1215 = vmul.f32 %v1207, 0.044715
      %v1216 = vmul.f32 %v1208, 0.044715
      %v1217 = vmul.f32 %v1209, 0.044715
      %v1218 = vmul.f32 %v1210, 0.044715
      %v1219 = vmul.f32 %v1211, 0.044715
      %v1220 = vmul.f32 %v1212, 0.044715
      %v1221 = vmul.f32 %v1213, 0.044715
      %v1222 = vmul.f32 %v1214, 0.044715
      %v1223 = vadd.f32 %v1191, %v1215
      %v1224 = vadd.f32 %v1192, %v1216
      %v1225 = vadd.f32 %v1193, %v1217
      %v1226 = vadd.f32 %v1194, %v1218
      %v1227 = vadd.f32 %v1195, %v1219
      %v1228 = vadd.f32 %v1196, %v1220
      %v1229 = vadd.f32 %v1197, %v1221
      %v1230 = vadd.f32 %v1198, %v1222
      %v1231 = vmul.f32 %v1223, 0.7978846
      %v1232 = vmul.f32 %v1224, 0.7978846
      %v1233 = vmul.f32 %v1225, 0.7978846
      %v1234 = vmul.f32 %v1226, 0.7978846
      %v1235 = vmul.f32 %v1227, 0.7978846
      %v1236 = vmul.f32 %v1228, 0.7978846
      %v1237 = vmul.f32 %v1229, 0.7978846
      %v1238 = vmul.f32 %v1230, 0.7978846
      %v1239 = vtanh.pop %v1231
      %v1240 = vtanh.pop %v1232
      %v1241 = vtanh.pop %v1233
      %v1242 = vtanh.pop %v1234
      %v1243 = vtanh.pop %v1235
      %v1244 = vtanh.pop %v1236
      %v1245 = vtanh.pop %v1237
      %v1246 = vtanh.pop %v1238
      %v1247 = vadd.f32 %v1239, 1.0
      %v1248 = vadd.f32 %v1240, 1.0
      %v1249 = vadd.f32 %v1241, 1.0
      %v1250 = vadd.f32 %v1242, 1.0
      %v1251 = vadd.f32 %v1243, 1.0
      %v1252 = vadd.f32 %v1244, 1.0
      %v1253 = vadd.f32 %v1245, 1.0
      %v1254 = vadd.f32 %v1246, 1.0
      %v1255 = vmul.f32 %v1247, 0.5
      %v1256 = vmul.f32 %v1248, 0.5
      %v1257 = vmul.f32 %v1249, 0.5
      %v1258 = vmul.f32 %v1250, 0.5
      %v1259 = vmul.f32 %v1251, 0.5
      %v1260 = vmul.f32 %v1252, 0.5
      %v1261 = vmul.f32 %v1253, 0.5
      %v1262 = vmul.f32 %v1254, 0.5
      %v1263 = vmul.f32 %v1191, %v1255
      %v1264 = vmul.f32 %v1192, %v1256
      %v1265 = vmul.f32 %v1193, %v1257
      %v1266 = vmul.f32 %v1194, %v1258
      %v1267 = vmul.f32 %v1195, %v1259
      %v1268 = vmul.f32 %v1196, %v1260
      %v1269 = vmul.f32 %v1197, %v1261
      %v1270 = vmul.f32 %v1198, %v1262
      %v1271 = vld [vmem:[%s11] sm:$0xff]
      %v1272 = vld [vmem:[%s11 + $0x8] sm:$0xff]
      %v1273 = vld [vmem:[%s11 + $0x10] sm:$0xff]
      %v1274 = vld [vmem:[%s11 + $0x18] sm:$0xff]
      %1276 = vset.pattern.permute.xlu0 0
      %1277 = vperm.xlu0 %1276, %v1271
      %v1278 = vpop.permute.xlu0 %1277
      %1281 = vset.pattern.permute.xlu0 0
      %1282 = vperm.xlu0 %1281, %v1272
      %v1283 = vpop.permute.xlu0 %1282
      %1286 = vset.pattern.permute.xlu0 0
      %1287 = vperm.xlu0 %1286, %v1273
      %v1288 = vpop.permute.xlu0 %1287
      %1291 = vset.pattern.permute.xlu0 0
      %1292 = vperm.xlu0 %1291, %v1274
      %v1293 = vpop.permute.xlu0 %1292
      %v1295 = vmul.f32 %v1263, %v1278
      %v1296 = vmul.f32 %v1264, %v1278
      %v1297 = vmul.f32 %v1265, %v1283
      %v1298 = vmul.f32 %v1266, %v1283
      %v1299 = vmul.f32 %v1267, %v1288
      %v1300 = vmul.f32 %v1268, %v1288
      %v1301 = vmul.f32 %v1269, %v1293
      %v1302 = vmul.f32 %v1270, %v1293
      %v1303 = vadd.f32 %v1295, %v1297
      %v1304 = vadd.f32 %v1303, %v1299
      %v1305 = vadd.f32 %v1304, %v1301
      %v1306 = vrot.slane %v1305, 4
      %v1307 = vadd.f32 %v1305, %v1306
      %v1308 = vrot.slane %v1307, 2
      %v1309 = vadd.f32 %v1307, %v1308
      %v1310 = vrot.slane %v1309, 1
      %v1311 = vadd.f32 %v1309, %v1310
      %v1312 = vadd.f32 %v1296, %v1298
      %v1313 = vadd.f32 %v1312, %v1300
      %v1314 = vadd.f32 %v1313, %v1302
      %v1315 = vrot.slane %v1314, 4
      %v1316 = vadd.f32 %v1314, %v1315
      %v1317 = vrot.slane %v1316, 2
      %v1318 = vadd.f32 %v1316, %v1317
      %v1319 = vrot.slane %v1318, 1
      %v1320 = vadd.f32 %v1318, %v1319
      %v1321 = vld [vmem:[%s12] sm:$0x1]
      %1323 = vset.pattern.permute.xlu0 0
      %1324 = vperm.xlu0 %1323, %v1321
      %v1325 = vpop.permute.xlu0 %1324
      %v1327 = vlaneseq
      %v1328 = vshrl.u32 %v1327, 7
      %v1329 = vsub.s32 0, %v1328
      %v1330 = vrot.slane %v1325, %v1329
      %v1331 = vadd.f32 %v1311, %v1330
      %v1332 = vadd.f32 %v1320, %v1330
      %1333 = vset.pattern.permute.xlu0 1
      %1334 = vperm.xlu0 %1333, %v1271
      %v1335 = vpop.permute.xlu0 %1334
      %1337 = vset.pattern.permute.xlu0 1
      %1338 = vperm.xlu0 %1337, %v1272
      %v1339 = vpop.permute.xlu0 %1338
      %1341 = vset.pattern.permute.xlu0 1
      %1342 = vperm.xlu0 %1341, %v1273
      %v1343 = vpop.permute.xlu0 %1342
      %1345 = vset.pattern.permute.xlu0 1
      %1346 = vperm.xlu0 %1345, %v1274
      %v1347 = vpop.permute.xlu0 %1346
      %v1349 = vmul.f32 %v1263, %v1335
      %v1350 = vmul.f32 %v1264, %v1335
      %v1351 = vmul.f32 %v1265, %v1339
      %v1352 = vmul.f32 %v1266, %v1339
      %v1353 = vmul.f32 %v1267, %v1343
      %v1354 = vmul.f32 %v1268, %v1343
      %v1355 = vmul.f32 %v1269, %v1347
      %v1356 = vmul.f32 %v1270, %v1347
      %v1357 = vadd.f32 %v1349, %v1351
      %v1358 = vadd.f32 %v1357, %v1353
      %v1359 = vadd.f32 %v1358, %v1355
      %v1360 = vrot.slane %v1359, 4
      %v1361 = vadd.f32 %v1359, %v1360
      %v1362 = vrot.slane %v1361, 2
      %v1363 = vadd.f32 %v1361, %v1362
      %v1364 = vrot.slane %v1363, 1
      %v1365 = vadd.f32 %v1363, %v1364
      %v1366 = vadd.f32 %v1350, %v1352
      %v1367 = vadd.f32 %v1366, %v1354
      %v1368 = vadd.f32 %v1367, %v1356
      %v1369 = vrot.slane %v1368, 4
      %v1370 = vadd.f32 %v1368, %v1369
      %v1371 = vrot.slane %v1370, 2
      %v1372 = vadd.f32 %v1370, %v1371
      %v1373 = vrot.slane %v1372, 1
      %v1374 = vadd.f32 %v1372, %v1373
      %1375 = vset.pattern.permute.xlu0 1
      %1376 = vperm.xlu0 %1375, %v1321
      %v1377 = vpop.permute.xlu0 %1376
      %v1379 = vlaneseq
      %v1380 = vshrl.u32 %v1379, 7
      %v1381 = vsub.s32 0, %v1380
      %v1382 = vrot.slane %v1377, %v1381
      %v1383 = vadd.f32 %v1365, %v1382
      %v1384 = vadd.f32 %v1374, %v1382
      %vm1385 = vcmask 1040384
      %v1386 = vsel %vm1385, %v1331, %v1383
      %v1387 = vsel %vm1385, %v1332, %v1384
      %v1390 = vcombine.low %v1386, %v1387
      %v1392 = vunpack.c.l.s4 1983009808
      %v1393 = vunpack.c.0.s8 %v1392
      %v1394 = vlaneseq
      %v1395 = vshrl.u32 %v1394, 7
      %v1396 = vsub.s32 %v1393, %v1395
      %v1397 = vrot.slane %v1390, %v1396
      %v1399 = vadd.f32 %v1057, %v1397
      %v1400 = vmul.f32 %v1399, %v1054
      %v1401 = vadd.f32 %v1400, %v1017
      %1402 = vst [vmem:[%s460] sm:$0xf] %v1401
      %p1403 = scmp.lt.s32.totalorder %s24, 1
      %s1404 = scalar_select %p1403, %s24, 1
      %s1405 = smul.addr %s1404, 2
      %s1406 = smul.addr %s1405, 2
      %s1407 = scalar_lea.vmem %s13, %s1406
      // Predicated region
      $region73: #{humus_net_forward.4} parent=71 // pred_check
        %p1408 = pneg %p325
      $region74: #{humus_net_forward.4} parent=71 // pred_check_branch
        %1410 = sbr.rel (%p1408) target = $region76
      $region75: #{humus_net_forward.4} parent=71 // pred_region
        _
      $region76: #{humus_net_forward.4} parent=71 // pred_fallthru
        _
    $region72: #{humus_net_forward.4} parent=5 // pred_fallthru
      _
    %p1411 = scmp.le.s32.totalorder 2, %s19
    // Predicated region
    $region77: #{humus_net_forward.4} parent=5 // pred_check
      %p1412 = pneg %p1411
    $region78: #{humus_net_forward.4} parent=5 // pred_check_branch
      %1414 = sbr.rel (%p1412) target = $region80
    $region79: #{humus_net_forward.4} parent=5 // pred_region
      %s1415 = ssub.s32 %s19, 2
      // Predicated region
      $region81: #{humus_net_forward.4} parent=79 // pred_check
        %p1416 = pneg %p331
      $region82: #{humus_net_forward.4} parent=79 // pred_check_branch
        %1418 = sbr.rel (%p1416) target = $region84
      $region83: #{humus_net_forward.4} parent=79 // pred_region
        %p1419 = scmp.lt.s32.totalorder %s25, 1
        %s1420 = scalar_select %p1419, %s25, 1
        %s1421 = smul.addr %s1420, 2
        %s1422 = smul.addr %s1421, 2
        %s1423 = scalar_lea.vmem %s13, %s1422
      $region84: #{humus_net_forward.4} parent=79 // pred_fallthru
        _
    $region80: #{humus_net_forward.4} parent=5 // pred_fallthru
      _
  $region6: #{humus_net_forward.4} parent=0 // loop_footer
    %s23 = sadd.s32 1, %s19
  $region7: #{humus_net_forward.4} parent=0 // loop_footer_branch
    %18 = sbr.rel target = $region3
  $region8: #{humus_net_forward.4} parent=0 // loop_exit
    _

// kernel: humus_net_forward.5
$region0: #{humus_net_forward.5}
  #allocation0 [shape = 'u32[]', space=smem, size = 0x4, offset = 0x4, fixed_abs, tag = 'smem constant byte address 0x4 - core index']
  #allocation1 [shape = 'u32[144,128]{1,0:T(1,128)}', space=vmem, size = 0x12000, scoped, tag = 'internal scratch']
  #allocation2 [shape = 'f32[1]{0:T(128)S(6)}', space=smem, size = 0x200, scoped, tag = 'scoped memory for humus_net_forward.5']
  #allocation3 [shape = 'f32[1]{0:T(128)S(6)}', space=smem, size = 0x200, scoped, tag = 'scoped memory for humus_net_forward.5']
  %s0 = inlined_call_operand.vmem [shape: f32[2,32,16], index: 0, kind: input, shape index: {}]
  %s1 = inlined_call_operand.vmem [shape: f32[2,32,16], index: 1, kind: input, shape index: {}]
  %s2 = inlined_call_operand.vmem [shape: f32[2,1,16], index: 2, kind: input, shape index: {}]
  %s3 = inlined_call_operand.<no memory space> [shape: f32[1], index: 3, kind: input, shape index: {}]
  %s4 = inlined_call_operand.vmem [shape: f32[2], index: 4, kind: input, shape index: {}]
  %s5 = inlined_call_operand.<no memory space> [shape: f32[1], index: 5, kind: input, shape index: {}]
  %s6 = inlined_call_operand.vmem [shape: f32[2,32,16], index: 6, kind: output, shape index: {0}]
  %s7 = inlined_call_operand.vmem [shape: f32[2,1,16], index: 7, kind: output, shape index: {1}]
  %8 = xla_tuple %s6, %s7
  %s9 = sld [smem:[#allocation0]]
  $region69: #{humus_net_forward.5} parent=0
    _
  %s11 = ssub.s32 1, %s9
  %s12 = scalar_select 0, %s11, %s9
  %13 = sst [smem:[#allocation2]] %s3
  %14 = sst [smem:[#allocation3]] %s5
  $region1: #{humus_net_forward.5} parent=0
    #allocation4 [shape = 'u8[512]{0}', space=smem, size = 0x200, scoped, tag = 'input window, operand 4, single buffered']
    #allocation5 [shape = 's32[2]{0}', space=sflag, size = 0x8, scoped, tag = 'scoped memory for humus_net_forward.5']
    %15 = vsyncpa [#allocation5], 0
    loop: start=0, step=1, limit=4
    $region2: #{humus_net_forward.5} parent=1 // loop_pre_header
      _
    $region3: #{humus_net_forward.5} parent=1 // loop_header
      %s17 = sphi 0, %s21
      %p18 = scmp.ge.s32.totalorder %s17, 4
      %s27 = sphi 0, %s29
      %s30 = sphi 0, %s27
      %s31 = sphi 0, %s30
      %s47 = sphi 0, %s31
      %s53 = sphi 0, %s55
      %s56 = sphi 0, %s53
      %s57 = sphi 0, %s56
      %s73 = sphi 0, %s57
      %s79 = sphi 0, %s81
      %s82 = sphi 0, %s79
      %s83 = sphi 0, %s82
      %s99 = sphi 0, %s83
      %s103 = sphi 0, %s103
      %s105 = sphi 0, %s103
      %s106 = sphi 0, %s105
      %s120 = sphi 0, %s106
      %s124 = sphi 0, %s124
      %s126 = sphi 0, %s124
      %s127 = sphi 0, %s126
      %s141 = sphi 0, %s127
      %s145 = sphi 0, %s145
      %s147 = sphi 0, %s145
      %s148 = sphi 0, %s147
      %s162 = sphi 0, %s148
      %s168 = sphi 0, %s170
      %s171 = sphi 0, %s168
      %s172 = sphi 0, %s171
      %s188 = sphi 0, %s172
      %s194 = sphi 0, %s196
      %s197 = sphi 0, %s194
      %s198 = sphi 0, %s197
      %s214 = sphi 0, %s198
    $region4: #{humus_net_forward.5} parent=1 // loop_header_branch
      %20 = sbr.rel (%p18) target = $region8
    $region5: #{humus_net_forward.5} parent=1 // loop_body
      %s22 = ssub.s32 %s17, 1
      %s23 = ssub.s32 %s17, 2
      %s24 = sadd.s32 %s17, 1
      %s25 = ssub.s32 %s17, %s24
      %p26 = scmp.eq.s32.totalorder %s25, 0
      %s28 = sadd.s32 %s27, 1
      %s29 = scalar_select %p26, %s27, %s28
      %p32 = pneg %p26
      %p33 = scmp.eq.s32.totalorder %s17, 1
      %p34 = por %p32, %p33
      %p35 = scmp.ne.s32.totalorder %s27, %s30
      %p36 = scmp.eq.s32.totalorder %s17, 0
      %p37 = por %p35, %p36
      %p38 = scmp.ne.s32.totalorder %s27, %s30
      %p39 = scmp.eq.s32.totalorder %s22, 1
      %p40 = por %p38, %p39
      %p41 = scmp.ne.s32.totalorder %s30, %s31
      %p42 = scmp.eq.s32.totalorder %s22, 0
      %p43 = por %p41, %p42
      %p44 = scmp.ne.s32.totalorder %s30, %s31
      %p45 = scmp.eq.s32.totalorder %s23, 1
      %p46 = por %p44, %p45
      %p48 = scmp.ne.s32.totalorder %s31, %s47
      %p49 = scmp.eq.s32.totalorder %s23, 0
      %p50 = por %p48, %p49
      %s51 = ssub.s32 %s17, %s24
      %p52 = scmp.eq.s32.totalorder %s51, 0
      %s54 = sadd.s32 %s53, 1
      %s55 = scalar_select %p52, %s53, %s54
      %p58 = pneg %p52
      %p59 = scmp.eq.s32.totalorder %s17, 1
      %p60 = por %p58, %p59
      %p61 = scmp.ne.s32.totalorder %s53, %s56
      %p62 = scmp.eq.s32.totalorder %s17, 0
      %p63 = por %p61, %p62
      %p64 = scmp.ne.s32.totalorder %s53, %s56
      %p65 = scmp.eq.s32.totalorder %s22, 1
      %p66 = por %p64, %p65
      %p67 = scmp.ne.s32.totalorder %s56, %s57
      %p68 = scmp.eq.s32.totalorder %s22, 0
      %p69 = por %p67, %p68
      %p70 = scmp.ne.s32.totalorder %s56, %s57
      %p71 = scmp.eq.s32.totalorder %s23, 1
      %p72 = por %p70, %p71
      %p74 = scmp.ne.s32.totalorder %s57, %s73
      %p75 = scmp.eq.s32.totalorder %s23, 0
      %p76 = por %p74, %p75
      %s77 = ssub.s32 %s17, %s24
      %p78 = scmp.eq.s32.totalorder %s77, 0
      %s80 = sadd.s32 %s79, 1
      %s81 = scalar_select %p78, %s79, %s80
      %p84 = pneg %p78
      %p85 = scmp.eq.s32.totalorder %s17, 1
      %p86 = por %p84, %p85
      %p87 = scmp.ne.s32.totalorder %s79, %s82
      %p88 = scmp.eq.s32.totalorder %s17, 0
      %p89 = por %p87, %p88
      %p90 = scmp.ne.s32.totalorder %s79, %s82
      %p91 = scmp.eq.s32.totalorder %s22, 1
      %p92 = por %p90, %p91
      %p93 = scmp.ne.s32.totalorder %s82, %s83
      %p94 = scmp.eq.s32.totalorder %s22, 0
      %p95 = por %p93, %p94
      %p96 = scmp.ne.s32.totalorder %s82, %s83
      %p97 = scmp.eq.s32.totalorder %s23, 1
      %p98 = por %p96, %p97
      %p100 = scmp.ne.s32.totalorder %s83, %s99
      %p101 = scmp.eq.s32.totalorder %s23, 0
      %p102 = por %p100, %p101
      %s104 = sadd.s32 %s103, 1
      %p107 = scmp.eq.s32.totalorder %s17, 1
      %p108 = scmp.ne.s32.totalorder %s103, %s105
      %p109 = scmp.eq.s32.totalorder %s17, 0
      %p110 = por %p108, %p109
      %p111 = scmp.ne.s32.totalorder %s103, %s105
      %p112 = scmp.eq.s32.totalorder %s22, 1
      %p113 = por %p111, %p112
      %p114 = scmp.ne.s32.totalorder %s105, %s106
      %p115 = scmp.eq.s32.totalorder %s22, 0
      %p116 = por %p114, %p115
      %p117 = scmp.ne.s32.totalorder %s105, %s106
      %p118 = scmp.eq.s32.totalorder %s23, 1
      %p119 = por %p117, %p118
      %p121 = scmp.ne.s32.totalorder %s106, %s120
      %p122 = scmp.eq.s32.totalorder %s23, 0
      %p123 = por %p121, %p122
      %s125 = sadd.s32 %s124, 1
      %p128 = scmp.eq.s32.totalorder %s17, 1
      %p129 = scmp.ne.s32.totalorder %s124, %s126
      %p130 = scmp.eq.s32.totalorder %s17, 0
      %p131 = por %p129, %p130
      %p132 = scmp.ne.s32.totalorder %s124, %s126
      %p133 = scmp.eq.s32.totalorder %s22, 1
      %p134 = por %p132, %p133
      %p135 = scmp.ne.s32.totalorder %s126, %s127
      %p136 = scmp.eq.s32.totalorder %s22, 0
      %p137 = por %p135, %p136
      %p138 = scmp.ne.s32.totalorder %s126, %s127
      %p139 = scmp.eq.s32.totalorder %s23, 1
      %p140 = por %p138, %p139
      %p142 = scmp.ne.s32.totalorder %s127, %s141
      %p143 = scmp.eq.s32.totalorder %s23, 0
      %p144 = por %p142, %p143
      %s146 = sadd.s32 %s145, 1
      %p149 = scmp.eq.s32.totalorder %s17, 1
      %p150 = scmp.ne.s32.totalorder %s145, %s147
      %p151 = scmp.eq.s32.totalorder %s17, 0
      %p152 = por %p150, %p151
      %p153 = scmp.ne.s32.totalorder %s145, %s147
      %p154 = scmp.eq.s32.totalorder %s22, 1
      %p155 = por %p153, %p154
      %p156 = scmp.ne.s32.totalorder %s147, %s148
      %p157 = scmp.eq.s32.totalorder %s22, 0
      %p158 = por %p156, %p157
      %p159 = scmp.ne.s32.totalorder %s147, %s148
      %p160 = scmp.eq.s32.totalorder %s23, 1
      %p161 = por %p159, %p160
      %p163 = scmp.ne.s32.totalorder %s148, %s162
      %p164 = scmp.eq.s32.totalorder %s23, 0
      %p165 = por %p163, %p164
      %s166 = ssub.s32 %s17, %s24
      %p167 = scmp.eq.s32.totalorder %s166, 0
      %s169 = sadd.s32 %s168, 1
      %s170 = scalar_select %p167, %s168, %s169
      %p173 = pneg %p167
      %p174 = scmp.eq.s32.totalorder %s17, 1
      %p175 = por %p173, %p174
      %p176 = scmp.ne.s32.totalorder %s168, %s171
      %p177 = scmp.eq.s32.totalorder %s17, 0
      %p178 = por %p176, %p177
      %p179 = scmp.ne.s32.totalorder %s168, %s171
      %p180 = scmp.eq.s32.totalorder %s22, 1
      %p181 = por %p179, %p180
      %p182 = scmp.ne.s32.totalorder %s171, %s172
      %p183 = scmp.eq.s32.totalorder %s22, 0
      %p184 = por %p182, %p183
      %p185 = scmp.ne.s32.totalorder %s171, %s172
      %p186 = scmp.eq.s32.totalorder %s23, 1
      %p187 = por %p185, %p186
      %p189 = scmp.ne.s32.totalorder %s172, %s188
      %p190 = scmp.eq.s32.totalorder %s23, 0
      %p191 = por %p189, %p190
      %s192 = ssub.s32 %s17, %s24
      %p193 = scmp.eq.s32.totalorder %s192, 0
      %s195 = sadd.s32 %s194, 1
      %s196 = scalar_select %p193, %s194, %s195
      %p199 = pneg %p193
      %p200 = scmp.eq.s32.totalorder %s17, 1
      %p201 = por %p199, %p200
      %p202 = scmp.ne.s32.totalorder %s194, %s197
      %p203 = scmp.eq.s32.totalorder %s17, 0
      %p204 = por %p202, %p203
      %p205 = scmp.ne.s32.totalorder %s194, %s197
      %p206 = scmp.eq.s32.totalorder %s22, 1
      %p207 = por %p205, %p206
      %p208 = scmp.ne.s32.totalorder %s197, %s198
      %p209 = scmp.eq.s32.totalorder %s22, 0
      %p210 = por %p208, %p209
      %p211 = scmp.ne.s32.totalorder %s197, %s198
      %p212 = scmp.eq.s32.totalorder %s23, 1
      %p213 = por %p211, %p212
      %p215 = scmp.ne.s32.totalorder %s198, %s214
      %p216 = scmp.eq.s32.totalorder %s23, 0
      %p217 = por %p215, %p216
      %p218 = scmp.le.s32.totalorder 1, %s17
      %p219 = scmp.lt.s32.totalorder %s17, 3
      %p220 = pnand %p218, %p219
      %p221 = pneg %p220
      // Predicated region
      $region9: #{humus_net_forward.5} parent=5 // pred_check
        _
      $region10: #{humus_net_forward.5} parent=5 // pred_check_branch
        %223 = sbr.rel (%p220) target = $region12
      $region11: #{humus_net_forward.5} parent=5 // pred_region
        %s224 = ssub.s32 %s17, 1
        // Predicated region
        $region13: #{humus_net_forward.5} parent=11 // pred_check
          %p225 = pneg %p116
        $region14: #{humus_net_forward.5} parent=11 // pred_check_branch
          %227 = sbr.rel (%p225) target = $region16
        $region15: #{humus_net_forward.5} parent=11 // pred_region
          _
        $region16: #{humus_net_forward.5} parent=11 // pred_fallthru
          _
        // Predicated region
        $region17: #{humus_net_forward.5} parent=11 // pred_check
          %p228 = pneg %p137
        $region18: #{humus_net_forward.5} parent=11 // pred_check_branch
          %230 = sbr.rel (%p228) target = $region20
        $region19: #{humus_net_forward.5} parent=11 // pred_region
          %s232 = ssub.s32 16, 16
          %233 = vsyncadd [#allocation5], %s232
          %s235 = sshll.u32 %s4, 4
          %s236 = int_to_ptr.vmem [resolvable:$true] %s235
          %238 = dma.vmem_to_smem %s236, 16, [#allocation4], [#allocation5]
        $region20: #{humus_net_forward.5} parent=11 // pred_fallthru
          _
        // Predicated region
        $region21: #{humus_net_forward.5} parent=11 // pred_check
          %p239 = pneg %p158
        $region22: #{humus_net_forward.5} parent=11 // pred_check_branch
          %241 = sbr.rel (%p239) target = $region24
        $region23: #{humus_net_forward.5} parent=11 // pred_region
          _
        $region24: #{humus_net_forward.5} parent=11 // pred_fallthru
          _
      $region12: #{humus_net_forward.5} parent=5 // pred_fallthru
        _
      %p242 = scmp.lt.s32.totalorder %s17, 2
      // Predicated region
      $region25: #{humus_net_forward.5} parent=5 // pred_check
        %p243 = pneg %p242
      $region26: #{humus_net_forward.5} parent=5 // pred_check_branch
        %245 = sbr.rel (%p243) target = $region28
      $region27: #{humus_net_forward.5} parent=5 // pred_region
        // Predicated region
        $region29: #{humus_net_forward.5} parent=27 // pred_check
          %p246 = pneg %p37
        $region30: #{humus_net_forward.5} parent=27 // pred_check_branch
          %248 = sbr.rel (%p246) target = $region32
        $region31: #{humus_net_forward.5} parent=27 // pred_region
          %p249 = scmp.lt.s32.totalorder %s17, 1
          %s250 = scalar_select %p249, %s17, 1
          %s251 = smul.addr %s250, 4
          %s252 = smul.addr %s251, 8
          %s253 = scalar_lea.vmem %s0, %s252
        $region32: #{humus_net_forward.5} parent=27 // pred_fallthru
          _
        // Predicated region
        $region33: #{humus_net_forward.5} parent=27 // pred_check
          %p254 = pneg %p63
        $region34: #{humus_net_forward.5} parent=27 // pred_check_branch
          %256 = sbr.rel (%p254) target = $region36
        $region35: #{humus_net_forward.5} parent=27 // pred_region
          %p257 = scmp.lt.s32.totalorder %s17, 1
          %s258 = scalar_select %p257, %s17, 1
          %s259 = smul.addr %s258, 4
          %s260 = smul.addr %s259, 8
          %s261 = scalar_lea.vmem %s1, %s260
        $region36: #{humus_net_forward.5} parent=27 // pred_fallthru
          _
        // Predicated region
        $region37: #{humus_net_forward.5} parent=27 // pred_check
          %p262 = pneg %p89
        $region38: #{humus_net_forward.5} parent=27 // pred_check_branch
          %264 = sbr.rel (%p262) target = $region40
        $region39: #{humus_net_forward.5} parent=27 // pred_region
          %p265 = scmp.lt.s32.totalorder %s17, 1
          %s266 = scalar_select %p265, %s17, 1
          %s267 = scalar_lea.vmem %s2, %s266
        $region40: #{humus_net_forward.5} parent=27 // pred_fallthru
          _
      $region28: #{humus_net_forward.5} parent=5 // pred_fallthru
        _
      %p268 = scmp.le.s32.totalorder 1, %s17
      %p269 = scmp.lt.s32.totalorder %s17, 3
      %p270 = pnand %p268, %p269
      %p271 = pneg %p270
      // Predicated region
      $region41: #{humus_net_forward.5} parent=5 // pred_check
        _
      $region42: #{humus_net_forward.5} parent=5 // pred_check_branch
        %273 = sbr.rel (%p270) target = $region44
      $region43: #{humus_net_forward.5} parent=5 // pred_region
        %s274 = ssub.s32 %s17, 1
        // Predicated region
        $region45: #{humus_net_forward.5} parent=43 // pred_check
          %p275 = pneg %p137
        $region46: #{humus_net_forward.5} parent=43 // pred_check_branch
          %277 = sbr.rel (%p275) target = $region48
        $region47: #{humus_net_forward.5} parent=43 // pred_region
          %278 = dma.done [#allocation5], 16
        $region48: #{humus_net_forward.5} parent=43 // pred_fallthru
          _
        %279 = sfence
        %p280 = scmp.lt.s32.totalorder %s22, 1
        %s281 = scalar_select %p280, %s22, 1
        %s282 = smul.addr %s281, 4
        %s283 = smul.addr %s282, 8
        %s284 = scalar_lea.vmem %s0, %s283
        %p285 = pneg %p43
        %p286 = pneg %p40
        %p287 = scmp.lt.s32.totalorder %s22, 1
        %s288 = scalar_select %p287, %s22, 1
        %s289 = smul.addr %s288, 4
        %s290 = smul.addr %s289, 8
        %s291 = scalar_lea.vmem %s1, %s290
        %p292 = pneg %p69
        %p293 = pneg %p66
        %p294 = scmp.lt.s32.totalorder %s22, 1
        %s295 = scalar_select %p294, %s22, 1
        %s296 = scalar_lea.vmem %s2, %s295
        %p297 = pneg %p95
        %p298 = pneg %p92
        %p299 = pneg %p116
        %p300 = pneg %p113
        %p301 = pneg %p137
        %p302 = pneg %p134
        %p303 = pneg %p158
        %p304 = pneg %p155
        %p305 = pneg %p184
        %p306 = pneg %p181
        %p307 = scmp.lt.s32.totalorder %s22, 1
        %s308 = scalar_select %p307, %s22, 1
        %s309 = smul.addr %s308, 4
        %s310 = smul.addr %s309, 8
        %s311 = scalar_lea.vmem %s6, %s310
        %p312 = pneg %p210
        %p313 = pneg %p207
        %p314 = scmp.lt.s32.totalorder %s22, 1
        %s315 = scalar_select %p314, %s22, 1
        %s316 = scalar_lea.vmem %s7, %s315
        %p317 = scmp.lt.s32.totalorder %s22, 1
        %s318 = scalar_select %p317, %s22, 1
        %s319 = smul.addr %s318, 4
        %s320 = smul.addr %s319, 8
        %s321 = scalar_lea.vmem %s0, %s320
        %p322 = scmp.lt.s32.totalorder %s22, 1
        %s323 = scalar_select %p322, %s22, 1
        %s324 = smul.addr %s323, 4
        %s325 = smul.addr %s324, 8
        %s326 = scalar_lea.vmem %s1, %s325
        %p327 = scmp.lt.s32.totalorder %s22, 1
        %s328 = scalar_select %p327, %s22, 1
        %s329 = scalar_lea.vmem %s2, %s328
        %p330 = scmp.lt.s32.totalorder %s22, 1
        %s331 = scalar_select %p330, %s22, 1
        %s332 = smul.addr %s331, 4
        %s333 = smul.addr %s332, 8
        %s334 = scalar_lea.vmem %s6, %s333
        %p335 = scmp.lt.s32.totalorder %s22, 1
        %s336 = scalar_select %p335, %s22, 1
        %s337 = scalar_lea.vmem %s7, %s336
        %v338 = vld [vmem:[%s321] sm:$0xff]
        %v339 = vld [vmem:[%s321 + $0x8] sm:$0xff]
        %v340 = vld [vmem:[%s321 + $0x10] sm:$0xff]
        %v341 = vld [vmem:[%s321 + $0x18] sm:$0xff]
        %s342 = sld [smem:[#allocation2]]
        %v343 = vld [vmem:[%s329] sm:$0x1]
        %v344 = vstv %s342
        %v345 = vmul.f32 %v344, %v343
        %v346 = vld [vmem:[%s326] sm:$0xff]
        %v347 = vld [vmem:[%s326 + $0x8] sm:$0xff]
        %v348 = vld [vmem:[%s326 + $0x10] sm:$0xff]
        %v349 = vld [vmem:[%s326 + $0x18] sm:$0xff]
        %v350 = vsub.f32 %v338, %v346
        %v351 = vsub.f32 %v339, %v347
        %v352 = vsub.f32 %v340, %v348
        %v353 = vsub.f32 %v341, %v349
        %v355 = vlaneseq
        %v356 = vshrl.u32 %v355, 7
        %v357 = vsub.s32 0, %v356
        %v358 = vrot.slane %v345, %v357
        %v360 = vmul.f32 %v358, %v350
        %v361 = vmul.f32 %v358, %v351
        %v362 = vmul.f32 %v358, %v352
        %v363 = vmul.f32 %v358, %v353
        %v364 = vsub.f32 %v338, %v360
        %v365 = vsub.f32 %v339, %v361
        %v366 = vsub.f32 %v340, %v362
        %v367 = vsub.f32 %v341, %v363
        %vm368 = vcmask 130048
        %369 = vst.msk [vmem:[%s334] sm:$0xff] %vm368, %v364
        %370 = vst.msk [vmem:[%s334 + $0x8] sm:$0xff] %vm368, %v365
        %371 = vst.msk [vmem:[%s334 + $0x10] sm:$0xff] %vm368, %v366
        %372 = vst.msk [vmem:[%s334 + $0x18] sm:$0xff] %vm368, %v367
        %v373 = vand.u32 2147483647, %v364
        %v374 = vand.u32 2147483647, %v365
        %v375 = vand.u32 2147483647, %v366
        %v376 = vand.u32 2147483647, %v367
        %v377 = vsel %vm368, %v373, 0.0
        %v378 = vsel %vm368, %v374, 0.0
        %v379 = vadd.f32 %v377, %v378
        %v380 = vrot.slane %v379, 4
        %v381 = vadd.f32 %v379, %v380
        %v382 = vrot.slane %v381, 2
        %v383 = vadd.f32 %v381, %v382
        %v384 = vrot.slane %v383, 1
        %v385 = vadd.f32 %v383, %v384
        %v386 = vrcp.pop 16.0
        %v387 = vmul.f32 %v385, %v386
        %v388 = vsel %vm368, %v375, 0.0
        %v389 = vsel %vm368, %v376, 0.0
        %v390 = vadd.f32 %v388, %v389
        %v391 = vrot.slane %v390, 4
        %v392 = vadd.f32 %v390, %v391
        %v393 = vrot.slane %v392, 2
        %v394 = vadd.f32 %v392, %v393
        %v395 = vrot.slane %v394, 1
        %v396 = vadd.f32 %v394, %v395
        %v397 = vmul.f32 %v396, %v386
        %s398 = sld [smem:[#allocation4]]
        %v399 = vstv %s398
        %v400 = vmul.f32 %v399, %v387
        %s401 = sld [smem:[#allocation4 + $0x1]]
        %v402 = vstv %s401
        %v403 = vmul.f32 %v402, %v397
        %v404 = vadd.f32 %v400, %v403
        %s405 = sld [smem:[#allocation3]]
        %v406 = vstv %s405
        %v407 = vadd.f32 %v404, %v406
        %v408 = vxor.u32 %v407, 2147483648
        %v409 = vmul.f32 %v408, 1.442695
        %v410 = vpow.pop %v409
        %v411 = vadd.f32 %v410, 1.0
        %v412 = vrcp.pop %v411
        %v413 = vmul.f32 1.0, %v412
        %vm414 = vcmask 122880
        %415 = vst.msk [vmem:[%s337] sm:$0x1] %vm414, %v413
        %p416 = scmp.lt.s32.totalorder %s22, 1
        %s417 = scalar_select %p416, %s22, 1
        %s418 = smul.addr %s417, 4
        %s419 = smul.addr %s418, 8
        %s420 = scalar_lea.vmem %s6, %s419
        %p421 = scmp.lt.s32.totalorder %s22, 1
        %s422 = scalar_select %p421, %s22, 1
        %s423 = scalar_lea.vmem %s7, %s422
        // Predicated region
        $region49: #{humus_net_forward.5} parent=43 // pred_check
          %p424 = pneg %p181
        $region50: #{humus_net_forward.5} parent=43 // pred_check_branch
          %426 = sbr.rel (%p424) target = $region52
        $region51: #{humus_net_forward.5} parent=43 // pred_region
          _
        $region52: #{humus_net_forward.5} parent=43 // pred_fallthru
          _
        // Predicated region
        $region53: #{humus_net_forward.5} parent=43 // pred_check
          %p427 = pneg %p207
        $region54: #{humus_net_forward.5} parent=43 // pred_check_branch
          %429 = sbr.rel (%p427) target = $region56
        $region55: #{humus_net_forward.5} parent=43 // pred_region
          _
        $region56: #{humus_net_forward.5} parent=43 // pred_fallthru
          _
      $region44: #{humus_net_forward.5} parent=5 // pred_fallthru
        _
      %p430 = scmp.le.s32.totalorder 2, %s17
      // Predicated region
      $region57: #{humus_net_forward.5} parent=5 // pred_check
        %p431 = pneg %p430
      $region58: #{humus_net_forward.5} parent=5 // pred_check_branch
        %433 = sbr.rel (%p431) target = $region60
      $region59: #{humus_net_forward.5} parent=5 // pred_region
        %s434 = ssub.s32 %s17, 2
        // Predicated region
        $region61: #{humus_net_forward.5} parent=59 // pred_check
          %p435 = pneg %p187
        $region62: #{humus_net_forward.5} parent=59 // pred_check_branch
          %437 = sbr.rel (%p435) target = $region64
        $region63: #{humus_net_forward.5} parent=59 // pred_region
          %p438 = scmp.lt.s32.totalorder %s23, 1
          %s439 = scalar_select %p438, %s23, 1
          %s440 = smul.addr %s439, 4
          %s441 = smul.addr %s440, 8
          %s442 = scalar_lea.vmem %s6, %s441
        $region64: #{humus_net_forward.5} parent=59 // pred_fallthru
          _
        // Predicated region
        $region65: #{humus_net_forward.5} parent=59 // pred_check
          %p443 = pneg %p213
        $region66: #{humus_net_forward.5} parent=59 // pred_check_branch
          %445 = sbr.rel (%p443) target = $region68
        $region67: #{humus_net_forward.5} parent=59 // pred_region
          %p446 = scmp.lt.s32.totalorder %s23, 1
          %s447 = scalar_select %p446, %s23, 1
          %s448 = scalar_lea.vmem %s7, %s447
        $region68: #{humus_net_forward.5} parent=59 // pred_fallthru
          _
      $region60: #{humus_net_forward.5} parent=5 // pred_fallthru
        _
    $region6: #{humus_net_forward.5} parent=1 // loop_footer
      %s21 = sadd.s32 1, %s17
    $region7: #{humus_net_forward.5} parent=1 // loop_footer_branch
      %16 = sbr.rel target = $region3
    $region8: #{humus_net_forward.5} parent=1 // loop_exit
      _
    %449 = vsyncpa [#allocation5], 1
    %s450 = scalar_lea.sflag [#allocation5], 1
    %451 = vsyncpa %s450, 1

</llo_original>
